<compile_context>
chip_gen: v7x
topology: tpu7x:2x2x1
jax: 0.10.0
libtpu: 0.0.40
codegen_flags: <defaults>
</compile_context>

<pallas_src>
import math
from functools import partial

import jax
import jax.numpy as jnp
from jax import lax
from jax.experimental import pallas as pl
from jax.experimental.pallas import tpu as pltpu

# ---- ptcolor constants (sRGB primaries, D65 white point) -------------------
_RGB2XYZ = ((0.412453, 0.357580, 0.180423),
            (0.212671, 0.715160, 0.072169),
            (0.019334, 0.119193, 0.950227))
_WHITE_D65 = (0.9504, 1.0000, 1.0888)
# White point pre-folded into the matrix rows (saves VPU muls per pixel).
_RGB2XYZ_W = (tuple(v / _WHITE_D65[0] for v in _RGB2XYZ[0]),
              _RGB2XYZ[1],
              tuple(v / _WHITE_D65[2] for v in _RGB2XYZ[2]))
_LAB_EPS = 0.008856
_LAB_KAPPA = 903.3
_PI = math.pi
_SUB = 8       # sublane strip height
_LANES = 128   # lane width


# ---- elementwise math helpers (Pallas-kernel only) ---------------------------
def _atan(x):
    """Cephes single-precision atan; divides moved to EUP via approx recip."""
    sign = jnp.where(x < 0.0, -1.0, jnp.where(x > 0.0, 1.0, 0.0))
    ax = jnp.abs(x)
    tan3pio8 = 2.414213562373095
    tanpio8 = 0.4142135623730951
    big = ax > tan3pio8
    mid = jnp.logical_and(ax > tanpio8, jnp.logical_not(big))
    z_big = -pl.reciprocal(jnp.where(big, ax, 1.0), approx=True)
    z_mid = (ax - 1.0) * pl.reciprocal(ax + 1.0, approx=True)
    zz = jnp.where(big, z_big, jnp.where(mid, z_mid, ax))
    y0 = jnp.where(big, _PI / 2.0, jnp.where(mid, _PI / 4.0, 0.0))
    z2 = zz * zz
    poly = ((((8.05374449538e-2 * z2 - 1.38776856032e-1) * z2
              + 1.99777106478e-1) * z2 - 3.33329491539e-1) * z2 * zz + zz)
    return sign * (y0 + poly)


def _atan2(y, x):
    # torch.atan2 semantics (atan2(0, 0) == 0).
    safe_x = jnp.where(x == 0.0, 1.0, x)
    base = _atan(y * pl.reciprocal(safe_x, approx=True))
    r = jnp.where(x > 0.0, base,
                  jnp.where(y >= 0.0, base + _PI, base - _PI))
    r = jnp.where(x == 0.0,
                  jnp.where(y > 0.0, _PI / 2.0,
                            jnp.where(y < 0.0, -_PI / 2.0, 0.0)),
                  r)
    return r


def _rgb_to_lch_hs(r, g, b, levels):
    """(S,128) gamma-encoded sRGB -> (L, C, hue already scaled to [0, levels))."""
    def inv_gamma(u):
        t = 0.04045
        u1 = jnp.maximum(u, t)
        hi = jnp.exp(2.4 * jnp.log((u1 + 0.055) * (1.0 / 1.055)))
        return jnp.where(u < t, u * (1.0 / 12.92), hi)

    r, g, b = inv_gamma(r), inv_gamma(g), inv_gamma(b)
    m = _RGB2XYZ_W
    x = m[0][0] * r + m[0][1] * g + m[0][2] * b
    y = m[1][0] * r + m[1][1] * g + m[1][2] * b
    z = m[2][0] * r + m[2][1] * g + m[2][2] * b

    def lab_f(t):
        t1 = jnp.maximum(t, _LAB_EPS)
        cube = jnp.exp(jnp.log(t1) * (1.0 / 3.0))
        return jnp.where(t > _LAB_EPS, cube,
                         (_LAB_KAPPA * t + 16.0) * (1.0 / 116.0))

    fx, fy, fz = lab_f(x), lab_f(y), lab_f(z)
    L = 116.0 * fy - 16.0
    a = 500.0 * (fx - fy)
    bb = 200.0 * (fy - fz)
    C = jnp.sqrt(a * a + bb * bb)
    # 180/pi and levels/360 folded into one constant; negative wrap by +levels.
    hs = _atan2(bb, a) * (levels / (2.0 * _PI))
    hs = jnp.where(hs < 0.0, hs + float(levels), hs)
    return L, C, hs


def _hue_ce(hs_i, hs_g, levels, eps, fast_ce):
    """Per-pixel hue-distribution cross-entropy, bins folded on the fly."""
    inv_norm = 1.0 / (1.0 + levels * eps)
    # Last bin first: it wraps into bin 0.
    tri_i_last = jnp.maximum(1.0 - jnp.abs(hs_i - float(levels - 1)), 0.0)
    tri_g_last = jnp.maximum(1.0 - jnp.abs(hs_g - float(levels - 1)), 0.0)
    ce = None
    s_pg = None
    for a in range(levels):
        if a == levels - 1 and levels > 1:
            tri_i, tri_g = tri_i_last, tri_g_last
        else:
            tri_i = jnp.maximum(1.0 - jnp.abs(hs_i - float(a)), 0.0)
            tri_g = jnp.maximum(1.0 - jnp.abs(hs_g - float(a)), 0.0)
            if a == 0:  # wrap-around
                tri_i = tri_i + tri_i_last
                tri_g = tri_g + tri_g_last
        p_g = jnp.clip(tri_g, 0.001, 0.999)  # gt distribution (eps = 0)
        if fast_ce:
            # (tri_i+eps)*inv_norm is provably inside [0.001, 0.999] for the
            # given (eps, levels): drop the clip and fold *inv_norm into the
            # log as an additive constant (applied once via sum(p_g)).
            term = p_g * jnp.log(tri_i + eps)
            s_pg = p_g if s_pg is None else s_pg + p_g
        else:
            p_i = jnp.clip((tri_i + eps) * inv_norm, 0.001, 0.999)
            term = p_g * jnp.log(p_i)
        ce = term if ce is None else ce + term
    if fast_ce:
        ce = ce + s_pg * math.log(inv_norm)
    return -ce


# ---- Pallas kernel -----------------------------------------------------------
def _lch_loss_kernel(img_ref, gt_ref, out_ref, *, levels, eps, hw,
                     fast_ce, mask_lc, mask_ce):
    # img_ref/gt_ref: (1, 3, R, 128) VMEM blocks (original dtype).
    # out_ref: (1, 1, 3, 8, 128) per-(batch, row-block) partial-sum slot.
    R = img_ref.shape[2]
    nstrips = R // _SUB
    need_pos = mask_lc or mask_ce

    if need_pos:
        # Hoisted out of the strip loop: in-block pixel index base.
        pos_base = (lax.broadcasted_iota(jnp.int32, (_SUB, _LANES), 0) * _LANES
                    + lax.broadcasted_iota(jnp.int32, (_SUB, _LANES), 1))
        row0_px = pl.program_id(1) * (R * _LANES)

    def body(s, carry):
        accL, accC, accH = carry
        off = pl.multiple_of(s * _SUB, _SUB)

        r_i = img_ref[0, 0, pl.ds(off, _SUB), :].astype(jnp.float32)
        g_i = img_ref[0, 1, pl.ds(off, _SUB), :].astype(jnp.float32)
        b_i = img_ref[0, 2, pl.ds(off, _SUB), :].astype(jnp.float32)
        r_g = gt_ref[0, 0, pl.ds(off, _SUB), :].astype(jnp.float32)
        g_g = gt_ref[0, 1, pl.ds(off, _SUB), :].astype(jnp.float32)
        b_g = gt_ref[0, 2, pl.ds(off, _SUB), :].astype(jnp.float32)

        L_i, C_i, hs_i = _rgb_to_lch_hs(r_i, g_i, b_i, levels)
        L_g, C_g, hs_g = _rgb_to_lch_hs(r_g, g_g, b_g, levels)

        dL = jnp.abs(L_i - L_g)
        dC = jnp.abs(C_i - C_g)
        ce = _hue_ce(hs_i, hs_g, levels, eps, fast_ce)

        if need_pos:
            # Select (not multiply) so NaN/Inf from ragged-tail garbage or the
            # CE of zero-padded pixels never reaches the accumulators.
            mask = (pos_base + (row0_px + off * _LANES)) < hw
            if mask_lc:
                dL = jnp.where(mask, dL, 0.0)
                dC = jnp.where(mask, dC, 0.0)
            if mask_ce:
                ce = jnp.where(mask, ce, 0.0)

        return accL + dL, accC + dC, accH + ce

    zeros = jnp.zeros((_SUB, _LANES), jnp.float32)
    accL, accC, accH = lax.fori_loop(
        0, nstrips, body, (zeros, zeros, zeros),
        unroll=2 if nstrips % 2 == 0 else 1)

    out_ref[0, 0, 0, :, :] = accL
    out_ref[0, 0, 1, :, :] = accC
    out_ref[0, 0, 2, :, :] = accH


# ---- wrapper -----------------------------------------------------------------
def lch_loss(img, gt, weightC=1.0, weightH=1.0, levels=4, eps=0.01,
             block_rows=512):
    B, C, H, W = img.shape
    assert C == 3, "rgb2lch expects 3 channels"
    hw = H * W

    # Pad the pixel stream only to the next multiple of 8*128 (needed for the
    # lane-dense (rows, 128) reshape). No dtype cast, no block-sized padding.
    strip_px = _SUB * _LANES
    hw_pad = pl.cdiv(hw, strip_px) * strip_px
    rows = hw_pad // _LANES

    cap = max(_SUB, min(int(block_rows), 1024))  # 1024 keeps v5e scoped VMEM safe
    cap = (cap // _SUB) * _SUB
    R = min(cap, rows)

    if hw_pad != hw:
        # A pad copy is unavoidable here anyway; extend it so row blocks divide
        # evenly (the padded tail is zeros, so no garbage enters the kernel).
        rows = pl.cdiv(rows, R) * R
        hw_pad = rows * _LANES

    nrb = pl.cdiv(rows, R)
    padded = hw_pad != hw
    ragged = (rows % R) != 0          # last block over-covers HBM -> masked reads
    mask_lc = ragged                  # garbage only possible in the ragged tail
    mask_ce = ragged or padded        # CE of zero-padded pixels is nonzero -> mask

    inv_norm = 1.0 / (1.0 + levels * eps)
    fast_ce = (eps * inv_norm >= 0.001) and ((1.0 + eps) * inv_norm <= 0.999)

    def prep(x):
        x = x.reshape(B, 3, hw)                    # free reshape, keeps HBM layout
        if hw_pad != hw:
            x = jnp.pad(x, ((0, 0), (0, 0), (0, hw_pad - hw)))
        return x.reshape(B, 3, rows, _LANES)       # no dtype cast here

    img_p = prep(img)
    gt_p = prep(gt)

    kernel = partial(_lch_loss_kernel, levels=levels, eps=eps, hw=hw,
                     fast_ce=fast_ce, mask_lc=mask_lc, mask_ce=mask_ce)

    partials = pl.pallas_call(
        kernel,
        out_shape=jax.ShapeDtypeStruct((B, nrb, 3, _SUB, _LANES), jnp.float32),
        grid_spec=pltpu.PrefetchScalarGridSpec(
            num_scalar_prefetch=0,
            grid=(B, nrb),
            in_specs=[pl.BlockSpec((1, 3, R, _LANES), lambda b, r: (b, 0, r, 0)),
                      pl.BlockSpec((1, 3, R, _LANES), lambda b, r: (b, 0, r, 0))],
            out_specs=pl.BlockSpec((1, 1, 3, _SUB, _LANES),
                                   lambda b, r: (b, r, 0, 0, 0))),
        compiler_params=pltpu.CompilerParams(
            dimension_semantics=("parallel", "parallel")),
    )(img_p, gt_p)

    sums = jnp.sum(partials, axis=(0, 1, 3, 4))  # (3,): [sum|dL|, sum|dC|, sum CE]
    npix = B * hw
    loss_L = sums[0] / npix
    loss_C = sums[1] / npix
    loss_H = sums[2] / (npix * levels)
    # TODO(synk): only the weight=None branch of the PyTorch forward is implemented.
    return loss_L + weightC * loss_C + weightH * loss_H


# ---- pure-JAX reference (sanity check) ---------------------------------------
def _lch_loss_ref(img, gt, weightC=1.0, weightH=1.0, levels=4, eps=0.01):
    def rgb2lch(x):
        flat = jnp.moveaxis(x, 1, 0).reshape(3, -1).astype(jnp.float32)
        r, g, b = flat[0:1], flat[1:2], flat[2:3]

        def inv_gamma(u):
            t = 0.04045
            u1 = jnp.maximum(u, t)
            return jnp.where(u < t, u / 12.92, ((u1 + 0.055) / 1.055) ** 2.4)

        r, g, b = inv_gamma(r), inv_gamma(g), inv_gamma(b)
        m = _RGB2XYZ
        xx = m[0][0] * r + m[0][1] * g + m[0][2] * b
        yy = m[1][0] * r + m[1][1] * g + m[1][2] * b
        zz = m[2][0] * r + m[2][1] * g + m[2][2] * b
        xx = xx / _WHITE_D65[0]
        zz = zz / _WHITE_D65[2]

        def lab_f(t):
            t1 = jnp.maximum(t, _LAB_EPS)
            return jnp.where(t > _LAB_EPS, t1 ** (1.0 / 3.0),
                             (_LAB_KAPPA * t + 16.0) / 116.0)

        fx, fy, fz = lab_f(xx), lab_f(yy), lab_f(zz)
        L = 116.0 * fy - 16.0
        a = 500.0 * (fx - fy)
        bb = 200.0 * (fy - fz)
        Cc = jnp.sqrt(a * a + bb * bb)
        h = jnp.arctan2(bb, a) * (180.0 / _PI)
        h = jnp.where(h < 0.0, h + 360.0, h)
        return L, Cc, h

    def hue_dist(h, eps_):
        hs = h * (levels / 360.0)
        ps = [jnp.maximum(1.0 - jnp.abs(hs - float(a)), 0.0)
              for a in range(levels)]
        ps[0] = ps[0] + ps[levels - 1]
        p = jnp.stack(ps, 0)
        return (p + eps_) / (1.0 + levels * eps_)

    L_i, C_i, h_i = rgb2lch(img)
    L_g, C_g, h_g = rgb2lch(gt)
    loss_L = jnp.mean(jnp.abs(L_i - L_g))
    loss_C = jnp.mean(jnp.abs(C_i - C_g))
    p_i = jnp.clip(hue_dist(h_i, eps), 0.001, 0.999)
    p_g = jnp.clip(hue_dist(h_g, 0.0), 0.001, 0.999)
    loss_H = jnp.mean(-(p_g * jnp.log(p_i)))
    return loss_L + weightC * loss_C + weightH * loss_H


if __name__ == "__main__":
    key = jax.random.PRNGKey(0)
    k1, k2, k3, k4, k5, k6, k7, k8 = jax.random.split(key, 8)

    # Test 1: small image, single row-block per image (padded tail, masked).
    img = jax.random.uniform(k1, (2, 3, 16, 16), dtype=jnp.float32)
    gt = jax.random.uniform(k2, (2, 3, 16, 16), dtype=jnp.float32)
    loss = lch_loss(img, gt)
    jax.block_until_ready(loss)
    ref = _lch_loss_ref(img, gt)
    assert jnp.allclose(loss, ref, rtol=1e-3, atol=2e-3), (loss, ref)

    # Test 2: non-multiple-of-1024 pixel count + multiple row blocks
    # (zero-padded tail, multi-block grid, masked CE).
    img2 = jax.random.uniform(k3, (2, 3, 40, 40), dtype=jnp.float32)
    gt2 = jax.random.uniform(k4, (2, 3, 40, 40), dtype=jnp.float32)
    loss2 = lch_loss(img2, gt2, block_rows=8)
    jax.block_until_ready(loss2)
    ref2 = _lch_loss_ref(img2, gt2)
    assert jnp.allclose(loss2, ref2, rtol=1e-3, atol=2e-3), (loss2, ref2)

    # Test 3: pixel count is a multiple of 1024 but rows % R != 0 ->
    # ragged last block with unspecified OOB data, fully handled by the mask.
    img3 = jax.random.uniform(k5, (1, 3, 48, 64), dtype=jnp.float32)
    gt3 = jax.random.uniform(k6, (1, 3, 48, 64), dtype=jnp.float32)
    loss3 = lch_loss(img3, gt3, block_rows=16)
    jax.block_until_ready(loss3)
    ref3 = _lch_loss_ref(img3, gt3)
    assert jnp.allclose(loss3, ref3, rtol=1e-3, atol=2e-3), (loss3, ref3)

    # Test 4: perfectly divisible case -> completely unmasked fast path.
    img4 = jax.random.uniform(k7, (2, 3, 32, 32), dtype=jnp.float32)
    gt4 = jax.random.uniform(k8, (2, 3, 32, 32), dtype=jnp.float32)
    loss4 = lch_loss(img4, gt4)
    jax.block_until_ready(loss4)
    ref4 = _lch_loss_ref(img4, gt4)
    assert jnp.allclose(loss4, ref4, rtol=1e-3, atol=2e-3), (loss4, ref4)

    print("KERNEL_OK")
</pallas_src>

<mosaic_0001>
module attributes {stable_mosaic.version = 11 : i64} {
  func.func @_lch_loss_kernel(%arg0: i32, %arg1: i32, %arg2: memref<1x3x8x128xf32, #tpu.memory_space<vmem>>, %arg3: memref<1x3x8x128xf32, #tpu.memory_space<vmem>>, %arg4: memref<1x1x3x8x128xf32, #tpu.memory_space<vmem>>) attributes {dimension_semantics = [#tpu.dimension_semantics<parallel>, #tpu.dimension_semantics<parallel>], iteration_bounds = array<i64: 2, 1>, scalar_prefetch = 0 : i64, scratch_operands = 0 : i64, tpu.core_type = #tpu.core_type<tc>, window_params = [{transform_indices = @transform_0, window_bounds = array<i64: 1, 3, 8, 128>}, {transform_indices = @transform_1, window_bounds = array<i64: 1, 3, 8, 128>}, {transform_indices = @transform_2, window_bounds = array<i64: 1, 1, 3, 8, 128>}]} {
    %0 = tpu.iota {dimensions = array<i32: 0>} : vector<8x128xi32>
    %c128_i32 = arith.constant 128 : i32
    %1 = vector.broadcast %c128_i32 : i32 to vector<8x128xi32>
    %2 = arith.muli %0, %1 : vector<8x128xi32>
    %3 = tpu.iota {dimensions = array<i32: 1>} : vector<8x128xi32>
    %4 = arith.addi %2, %3 : vector<8x128xi32>
    %c1024_i32 = arith.constant 1024 : i32
    %5 = arith.muli %arg1, %c1024_i32 : i32
    %cst = arith.constant 0.000000e+00 : f32
    %6 = vector.broadcast %cst : f32 to vector<8x128xf32>
    %c0_i32 = arith.constant 0 : i32
    %c8_i32 = arith.constant 8 : i32
    %7 = arith.muli %c0_i32, %c8_i32 : i32
    %8 = tpu.assume_multiple %7, 8 : i32
    %c0 = arith.constant 0 : index
    %c0_0 = arith.constant 0 : index
    %9 = arith.index_cast %8 : i32 to index
    %c0_1 = arith.constant 0 : index
    %10 = vector.load %arg2[%c0, %c0_0, %9, %c0_1] : memref<1x3x8x128xf32, #tpu.memory_space<vmem>>, vector<1x1x8x128xf32>
    %11 = vector.shape_cast %10 : vector<1x1x8x128xf32> to vector<8x128xf32>
    %c0_2 = arith.constant 0 : index
    %c1 = arith.constant 1 : index
    %12 = arith.index_cast %8 : i32 to index
    %c0_3 = arith.constant 0 : index
    %13 = vector.load %arg2[%c0_2, %c1, %12, %c0_3] : memref<1x3x8x128xf32, #tpu.memory_space<vmem>>, vector<1x1x8x128xf32>
    %14 = vector.shape_cast %13 : vector<1x1x8x128xf32> to vector<8x128xf32>
    %c0_4 = arith.constant 0 : index
    %c2 = arith.constant 2 : index
    %15 = arith.index_cast %8 : i32 to index
    %c0_5 = arith.constant 0 : index
    %16 = vector.load %arg2[%c0_4, %c2, %15, %c0_5] : memref<1x3x8x128xf32, #tpu.memory_space<vmem>>, vector<1x1x8x128xf32>
    %17 = vector.shape_cast %16 : vector<1x1x8x128xf32> to vector<8x128xf32>
    %c0_6 = arith.constant 0 : index
    %c0_7 = arith.constant 0 : index
    %18 = arith.index_cast %8 : i32 to index
    %c0_8 = arith.constant 0 : index
    %19 = vector.load %arg3[%c0_6, %c0_7, %18, %c0_8] : memref<1x3x8x128xf32, #tpu.memory_space<vmem>>, vector<1x1x8x128xf32>
    %20 = vector.shape_cast %19 : vector<1x1x8x128xf32> to vector<8x128xf32>
    %c0_9 = arith.constant 0 : index
    %c1_10 = arith.constant 1 : index
    %21 = arith.index_cast %8 : i32 to index
    %c0_11 = arith.constant 0 : index
    %22 = vector.load %arg3[%c0_9, %c1_10, %21, %c0_11] : memref<1x3x8x128xf32, #tpu.memory_space<vmem>>, vector<1x1x8x128xf32>
    %23 = vector.shape_cast %22 : vector<1x1x8x128xf32> to vector<8x128xf32>
    %c0_12 = arith.constant 0 : index
    %c2_13 = arith.constant 2 : index
    %24 = arith.index_cast %8 : i32 to index
    %c0_14 = arith.constant 0 : index
    %25 = vector.load %arg3[%c0_12, %c2_13, %24, %c0_14] : memref<1x3x8x128xf32, #tpu.memory_space<vmem>>, vector<1x1x8x128xf32>
    %26 = vector.shape_cast %25 : vector<1x1x8x128xf32> to vector<8x128xf32>
    %cst_15 = arith.constant 4.045000e-02 : f32
    %27 = vector.broadcast %cst_15 : f32 to vector<8x128xf32>
    %28 = arith.maximumf %11, %27 : vector<8x128xf32>
    %cst_16 = arith.constant 5.500000e-02 : f32
    %29 = vector.broadcast %cst_16 : f32 to vector<8x128xf32>
    %30 = arith.addf %28, %29 : vector<8x128xf32>
    %cst_17 = arith.constant 0.947867274 : f32
    %31 = vector.broadcast %cst_17 : f32 to vector<8x128xf32>
    %32 = arith.mulf %30, %31 : vector<8x128xf32>
    %33 = math.log %32 : vector<8x128xf32>
    %cst_18 = arith.constant 2.400000e+00 : f32
    %34 = vector.broadcast %cst_18 : f32 to vector<8x128xf32>
    %35 = arith.mulf %34, %33 : vector<8x128xf32>
    %36 = math.exp %35 : vector<8x128xf32>
    %cst_19 = arith.constant 4.045000e-02 : f32
    %37 = vector.broadcast %cst_19 : f32 to vector<8x128xf32>
    %38 = arith.cmpf olt, %11, %37 : vector<8x128xf32>
    %cst_20 = arith.constant 0.0773993805 : f32
    %39 = vector.broadcast %cst_20 : f32 to vector<8x128xf32>
    %40 = arith.mulf %11, %39 : vector<8x128xf32>
    %41 = arith.select %38, %40, %36 : vector<8x128xi1>, vector<8x128xf32>
    %cst_21 = arith.constant 4.045000e-02 : f32
    %42 = vector.broadcast %cst_21 : f32 to vector<8x128xf32>
    %43 = arith.maximumf %14, %42 : vector<8x128xf32>
    %cst_22 = arith.constant 5.500000e-02 : f32
    %44 = vector.broadcast %cst_22 : f32 to vector<8x128xf32>
    %45 = arith.addf %43, %44 : vector<8x128xf32>
    %cst_23 = arith.constant 0.947867274 : f32
    %46 = vector.broadcast %cst_23 : f32 to vector<8x128xf32>
    %47 = arith.mulf %45, %46 : vector<8x128xf32>
    %48 = math.log %47 : vector<8x128xf32>
    %cst_24 = arith.constant 2.400000e+00 : f32
    %49 = vector.broadcast %cst_24 : f32 to vector<8x128xf32>
    %50 = arith.mulf %49, %48 : vector<8x128xf32>
    %51 = math.exp %50 : vector<8x128xf32>
    %cst_25 = arith.constant 4.045000e-02 : f32
    %52 = vector.broadcast %cst_25 : f32 to vector<8x128xf32>
    %53 = arith.cmpf olt, %14, %52 : vector<8x128xf32>
    %cst_26 = arith.constant 0.0773993805 : f32
    %54 = vector.broadcast %cst_26 : f32 to vector<8x128xf32>
    %55 = arith.mulf %14, %54 : vector<8x128xf32>
    %56 = arith.select %53, %55, %51 : vector<8x128xi1>, vector<8x128xf32>
    %cst_27 = arith.constant 4.045000e-02 : f32
    %57 = vector.broadcast %cst_27 : f32 to vector<8x128xf32>
    %58 = arith.maximumf %17, %57 : vector<8x128xf32>
    %cst_28 = arith.constant 5.500000e-02 : f32
    %59 = vector.broadcast %cst_28 : f32 to vector<8x128xf32>
    %60 = arith.addf %58, %59 : vector<8x128xf32>
    %cst_29 = arith.constant 0.947867274 : f32
    %61 = vector.broadcast %cst_29 : f32 to vector<8x128xf32>
    %62 = arith.mulf %60, %61 : vector<8x128xf32>
    %63 = math.log %62 : vector<8x128xf32>
    %cst_30 = arith.constant 2.400000e+00 : f32
    %64 = vector.broadcast %cst_30 : f32 to vector<8x128xf32>
    %65 = arith.mulf %64, %63 : vector<8x128xf32>
    %66 = math.exp %65 : vector<8x128xf32>
    %cst_31 = arith.constant 4.045000e-02 : f32
    %67 = vector.broadcast %cst_31 : f32 to vector<8x128xf32>
    %68 = arith.cmpf olt, %17, %67 : vector<8x128xf32>
    %cst_32 = arith.constant 0.0773993805 : f32
    %69 = vector.broadcast %cst_32 : f32 to vector<8x128xf32>
    %70 = arith.mulf %17, %69 : vector<8x128xf32>
    %71 = arith.select %68, %70, %66 : vector<8x128xi1>, vector<8x128xf32>
    %cst_33 = arith.constant 0.433978319 : f32
    %72 = vector.broadcast %cst_33 : f32 to vector<8x128xf32>
    %73 = arith.mulf %72, %41 : vector<8x128xf32>
    %cst_34 = arith.constant 0.376241595 : f32
    %74 = vector.broadcast %cst_34 : f32 to vector<8x128xf32>
    %75 = arith.mulf %74, %56 : vector<8x128xf32>
    %76 = arith.addf %73, %75 : vector<8x128xf32>
    %cst_35 = arith.constant 0.18983902 : f32
    %77 = vector.broadcast %cst_35 : f32 to vector<8x128xf32>
    %78 = arith.mulf %77, %71 : vector<8x128xf32>
    %79 = arith.addf %76, %78 : vector<8x128xf32>
    %cst_36 = arith.constant 2.126710e-01 : f32
    %80 = vector.broadcast %cst_36 : f32 to vector<8x128xf32>
    %81 = arith.mulf %80, %41 : vector<8x128xf32>
    %cst_37 = arith.constant 7.151600e-01 : f32
    %82 = vector.broadcast %cst_37 : f32 to vector<8x128xf32>
    %83 = arith.mulf %82, %56 : vector<8x128xf32>
    %84 = arith.addf %81, %83 : vector<8x128xf32>
    %cst_38 = arith.constant 7.216900e-02 : f32
    %85 = vector.broadcast %cst_38 : f32 to vector<8x128xf32>
    %86 = arith.mulf %85, %71 : vector<8x128xf32>
    %87 = arith.addf %84, %86 : vector<8x128xf32>
    %cst_39 = arith.constant 0.0177571643 : f32
    %88 = vector.broadcast %cst_39 : f32 to vector<8x128xf32>
    %89 = arith.mulf %88, %41 : vector<8x128xf32>
    %cst_40 = arith.constant 0.109471895 : f32
    %90 = vector.broadcast %cst_40 : f32 to vector<8x128xf32>
    %91 = arith.mulf %90, %56 : vector<8x128xf32>
    %92 = arith.addf %89, %91 : vector<8x128xf32>
    %cst_41 = arith.constant 0.872728705 : f32
    %93 = vector.broadcast %cst_41 : f32 to vector<8x128xf32>
    %94 = arith.mulf %93, %71 : vector<8x128xf32>
    %95 = arith.addf %92, %94 : vector<8x128xf32>
    %cst_42 = arith.constant 8.856000e-03 : f32
    %96 = vector.broadcast %cst_42 : f32 to vector<8x128xf32>
    %97 = arith.maximumf %79, %96 : vector<8x128xf32>
    %98 = math.log %97 : vector<8x128xf32>
    %cst_43 = arith.constant 0.333333343 : f32
    %99 = vector.broadcast %cst_43 : f32 to vector<8x128xf32>
    %100 = arith.mulf %98, %99 : vector<8x128xf32>
    %101 = math.exp %100 : vector<8x128xf32>
    %cst_44 = arith.constant 8.856000e-03 : f32
    %102 = vector.broadcast %cst_44 : f32 to vector<8x128xf32>
    %103 = arith.cmpf ogt, %79, %102 : vector<8x128xf32>
    %cst_45 = arith.constant 903.299987 : f32
    %104 = vector.broadcast %cst_45 : f32 to vector<8x128xf32>
    %105 = arith.mulf %104, %79 : vector<8x128xf32>
    %cst_46 = arith.constant 1.600000e+01 : f32
    %106 = vector.broadcast %cst_46 : f32 to vector<8x128xf32>
    %107 = arith.addf %105, %106 : vector<8x128xf32>
    %cst_47 = arith.constant 8.620690e-03 : f32
    %108 = vector.broadcast %cst_47 : f32 to vector<8x128xf32>
    %109 = arith.mulf %107, %108 : vector<8x128xf32>
    %110 = arith.select %103, %101, %109 : vector<8x128xi1>, vector<8x128xf32>
    %cst_48 = arith.constant 8.856000e-03 : f32
    %111 = vector.broadcast %cst_48 : f32 to vector<8x128xf32>
    %112 = arith.maximumf %87, %111 : vector<8x128xf32>
    %113 = math.log %112 : vector<8x128xf32>
    %cst_49 = arith.constant 0.333333343 : f32
    %114 = vector.broadcast %cst_49 : f32 to vector<8x128xf32>
    %115 = arith.mulf %113, %114 : vector<8x128xf32>
    %116 = math.exp %115 : vector<8x128xf32>
    %cst_50 = arith.constant 8.856000e-03 : f32
    %117 = vector.broadcast %cst_50 : f32 to vector<8x128xf32>
    %118 = arith.cmpf ogt, %87, %117 : vector<8x128xf32>
    %cst_51 = arith.constant 903.299987 : f32
    %119 = vector.broadcast %cst_51 : f32 to vector<8x128xf32>
    %120 = arith.mulf %119, %87 : vector<8x128xf32>
    %cst_52 = arith.constant 1.600000e+01 : f32
    %121 = vector.broadcast %cst_52 : f32 to vector<8x128xf32>
    %122 = arith.addf %120, %121 : vector<8x128xf32>
    %cst_53 = arith.constant 8.620690e-03 : f32
    %123 = vector.broadcast %cst_53 : f32 to vector<8x128xf32>
    %124 = arith.mulf %122, %123 : vector<8x128xf32>
    %125 = arith.select %118, %116, %124 : vector<8x128xi1>, vector<8x128xf32>
    %cst_54 = arith.constant 8.856000e-03 : f32
    %126 = vector.broadcast %cst_54 : f32 to vector<8x128xf32>
    %127 = arith.maximumf %95, %126 : vector<8x128xf32>
    %128 = math.log %127 : vector<8x128xf32>
    %cst_55 = arith.constant 0.333333343 : f32
    %129 = vector.broadcast %cst_55 : f32 to vector<8x128xf32>
    %130 = arith.mulf %128, %129 : vector<8x128xf32>
    %131 = math.exp %130 : vector<8x128xf32>
    %cst_56 = arith.constant 8.856000e-03 : f32
    %132 = vector.broadcast %cst_56 : f32 to vector<8x128xf32>
    %133 = arith.cmpf ogt, %95, %132 : vector<8x128xf32>
    %cst_57 = arith.constant 903.299987 : f32
    %134 = vector.broadcast %cst_57 : f32 to vector<8x128xf32>
    %135 = arith.mulf %134, %95 : vector<8x128xf32>
    %cst_58 = arith.constant 1.600000e+01 : f32
    %136 = vector.broadcast %cst_58 : f32 to vector<8x128xf32>
    %137 = arith.addf %135, %136 : vector<8x128xf32>
    %cst_59 = arith.constant 8.620690e-03 : f32
    %138 = vector.broadcast %cst_59 : f32 to vector<8x128xf32>
    %139 = arith.mulf %137, %138 : vector<8x128xf32>
    %140 = arith.select %133, %131, %139 : vector<8x128xi1>, vector<8x128xf32>
    %cst_60 = arith.constant 1.160000e+02 : f32
    %141 = vector.broadcast %cst_60 : f32 to vector<8x128xf32>
    %142 = arith.mulf %141, %125 : vector<8x128xf32>
    %cst_61 = arith.constant 1.600000e+01 : f32
    %143 = vector.broadcast %cst_61 : f32 to vector<8x128xf32>
    %144 = arith.subf %142, %143 : vector<8x128xf32>
    %145 = arith.subf %110, %125 : vector<8x128xf32>
    %cst_62 = arith.constant 5.000000e+02 : f32
    %146 = vector.broadcast %cst_62 : f32 to vector<8x128xf32>
    %147 = arith.mulf %146, %145 : vector<8x128xf32>
    %148 = arith.subf %125, %140 : vector<8x128xf32>
    %cst_63 = arith.constant 2.000000e+02 : f32
    %149 = vector.broadcast %cst_63 : f32 to vector<8x128xf32>
    %150 = arith.mulf %149, %148 : vector<8x128xf32>
    %151 = arith.mulf %147, %147 : vector<8x128xf32>
    %152 = arith.mulf %150, %150 : vector<8x128xf32>
    %153 = arith.addf %151, %152 : vector<8x128xf32>
    %154 = math.sqrt %153 : vector<8x128xf32>
    %cst_64 = arith.constant 0.000000e+00 : f32
    %155 = vector.broadcast %cst_64 : f32 to vector<8x128xf32>
    %156 = arith.cmpf oeq, %147, %155 : vector<8x128xf32>
    %cst_65 = arith.constant 1.000000e+00 : f32
    %157 = vector.broadcast %cst_65 : f32 to vector<8x128xf32>
    %158 = arith.select %156, %157, %147 : vector<8x128xi1>, vector<8x128xf32>
    %159 = tpu.reciprocal %158 {approx = true} : vector<8x128xf32> -> vector<8x128xf32>
    %160 = arith.mulf %150, %159 : vector<8x128xf32>
    %cst_66 = arith.constant 0.000000e+00 : f32
    %161 = vector.broadcast %cst_66 : f32 to vector<8x128xf32>
    %162 = arith.cmpf olt, %160, %161 : vector<8x128xf32>
    %cst_67 = arith.constant 0.000000e+00 : f32
    %163 = vector.broadcast %cst_67 : f32 to vector<8x128xf32>
    %164 = arith.cmpf ogt, %160, %163 : vector<8x128xf32>
    %cst_68 = arith.constant 1.000000e+00 : f32
    %cst_69 = arith.constant 0.000000e+00 : f32
    %165 = vector.broadcast %cst_68 : f32 to vector<8x128xf32>
    %166 = vector.broadcast %cst_69 : f32 to vector<8x128xf32>
    %167 = arith.select %164, %165, %166 : vector<8x128xi1>, vector<8x128xf32>
    %cst_70 = arith.constant -1.000000e+00 : f32
    %168 = vector.broadcast %cst_70 : f32 to vector<8x128xf32>
    %169 = arith.select %162, %168, %167 : vector<8x128xi1>, vector<8x128xf32>
    %170 = math.absf %160 : vector<8x128xf32>
    %cst_71 = arith.constant 2.41421366 : f32
    %171 = vector.broadcast %cst_71 : f32 to vector<8x128xf32>
    %172 = arith.cmpf ogt, %170, %171 : vector<8x128xf32>
    %cst_72 = arith.constant 0.414213568 : f32
    %173 = vector.broadcast %cst_72 : f32 to vector<8x128xf32>
    %174 = arith.cmpf ogt, %170, %173 : vector<8x128xf32>
    %cst_73 = arith.constant dense<true> : vector<8x128xi1>
    %175 = arith.xori %172, %cst_73 : vector<8x128xi1>
    %176 = arith.andi %174, %175 : vector<8x128xi1>
    %cst_74 = arith.constant 1.000000e+00 : f32
    %177 = vector.broadcast %cst_74 : f32 to vector<8x128xf32>
    %178 = arith.select %172, %170, %177 : vector<8x128xi1>, vector<8x128xf32>
    %179 = tpu.reciprocal %178 {approx = true} : vector<8x128xf32> -> vector<8x128xf32>
    %cst_75 = arith.constant 0.000000e+00 : f32
    %180 = vector.broadcast %cst_75 : f32 to vector<8x128xf32>
    %181 = arith.subf %180, %179 : vector<8x128xf32>
    %cst_76 = arith.constant 1.000000e+00 : f32
    %182 = vector.broadcast %cst_76 : f32 to vector<8x128xf32>
    %183 = arith.subf %170, %182 : vector<8x128xf32>
    %cst_77 = arith.constant 1.000000e+00 : f32
    %184 = vector.broadcast %cst_77 : f32 to vector<8x128xf32>
    %185 = arith.addf %170, %184 : vector<8x128xf32>
    %186 = tpu.reciprocal %185 {approx = true} : vector<8x128xf32> -> vector<8x128xf32>
    %187 = arith.mulf %183, %186 : vector<8x128xf32>
    %188 = arith.select %176, %187, %170 : vector<8x128xi1>, vector<8x128xf32>
    %189 = arith.select %172, %181, %188 : vector<8x128xi1>, vector<8x128xf32>
    %cst_78 = arith.constant 0.785398185 : f32
    %cst_79 = arith.constant 0.000000e+00 : f32
    %190 = vector.broadcast %cst_78 : f32 to vector<8x128xf32>
    %191 = vector.broadcast %cst_79 : f32 to vector<8x128xf32>
    %192 = arith.select %176, %190, %191 : vector<8x128xi1>, vector<8x128xf32>
    %cst_80 = arith.constant 1.57079637 : f32
    %193 = vector.broadcast %cst_80 : f32 to vector<8x128xf32>
    %194 = arith.select %172, %193, %192 : vector<8x128xi1>, vector<8x128xf32>
    %195 = arith.mulf %189, %189 : vector<8x128xf32>
    %cst_81 = arith.constant 0.0805374458 : f32
    %196 = vector.broadcast %cst_81 : f32 to vector<8x128xf32>
    %197 = arith.mulf %196, %195 : vector<8x128xf32>
    %cst_82 = arith.constant 0.138776854 : f32
    %198 = vector.broadcast %cst_82 : f32 to vector<8x128xf32>
    %199 = arith.subf %197, %198 : vector<8x128xf32>
    %200 = arith.mulf %199, %195 : vector<8x128xf32>
    %cst_83 = arith.constant 0.199777111 : f32
    %201 = vector.broadcast %cst_83 : f32 to vector<8x128xf32>
    %202 = arith.addf %200, %201 : vector<8x128xf32>
    %203 = arith.mulf %202, %195 : vector<8x128xf32>
    %cst_84 = arith.constant 0.333329499 : f32
    %204 = vector.broadcast %cst_84 : f32 to vector<8x128xf32>
    %205 = arith.subf %203, %204 : vector<8x128xf32>
    %206 = arith.mulf %205, %195 : vector<8x128xf32>
    %207 = arith.mulf %206, %189 : vector<8x128xf32>
    %208 = arith.addf %207, %189 : vector<8x128xf32>
    %209 = arith.addf %194, %208 : vector<8x128xf32>
    %210 = arith.mulf %169, %209 : vector<8x128xf32>
    %cst_85 = arith.constant 0.000000e+00 : f32
    %211 = vector.broadcast %cst_85 : f32 to vector<8x128xf32>
    %212 = arith.cmpf ogt, %147, %211 : vector<8x128xf32>
    %cst_86 = arith.constant 0.000000e+00 : f32
    %213 = vector.broadcast %cst_86 : f32 to vector<8x128xf32>
    %214 = arith.cmpf oge, %150, %213 : vector<8x128xf32>
    %cst_87 = arith.constant 3.14159274 : f32
    %215 = vector.broadcast %cst_87 : f32 to vector<8x128xf32>
    %216 = arith.addf %210, %215 : vector<8x128xf32>
    %cst_88 = arith.constant 3.14159274 : f32
    %217 = vector.broadcast %cst_88 : f32 to vector<8x128xf32>
    %218 = arith.subf %210, %217 : vector<8x128xf32>
    %219 = arith.select %214, %216, %218 : vector<8x128xi1>, vector<8x128xf32>
    %220 = arith.select %212, %210, %219 : vector<8x128xi1>, vector<8x128xf32>
    %cst_89 = arith.constant 0.000000e+00 : f32
    %221 = vector.broadcast %cst_89 : f32 to vector<8x128xf32>
    %222 = arith.cmpf oeq, %147, %221 : vector<8x128xf32>
    %cst_90 = arith.constant 0.000000e+00 : f32
    %223 = vector.broadcast %cst_90 : f32 to vector<8x128xf32>
    %224 = arith.cmpf ogt, %150, %223 : vector<8x128xf32>
    %cst_91 = arith.constant 0.000000e+00 : f32
    %225 = vector.broadcast %cst_91 : f32 to vector<8x128xf32>
    %226 = arith.cmpf olt, %150, %225 : vector<8x128xf32>
    %cst_92 = arith.constant -1.57079637 : f32
    %cst_93 = arith.constant 0.000000e+00 : f32
    %227 = vector.broadcast %cst_92 : f32 to vector<8x128xf32>
    %228 = vector.broadcast %cst_93 : f32 to vector<8x128xf32>
    %229 = arith.select %226, %227, %228 : vector<8x128xi1>, vector<8x128xf32>
    %cst_94 = arith.constant 1.57079637 : f32
    %230 = vector.broadcast %cst_94 : f32 to vector<8x128xf32>
    %231 = arith.select %224, %230, %229 : vector<8x128xi1>, vector<8x128xf32>
    %232 = arith.select %222, %231, %220 : vector<8x128xi1>, vector<8x128xf32>
    %cst_95 = arith.constant 0.636619746 : f32
    %233 = vector.broadcast %cst_95 : f32 to vector<8x128xf32>
    %234 = arith.mulf %232, %233 : vector<8x128xf32>
    %cst_96 = arith.constant 0.000000e+00 : f32
    %235 = vector.broadcast %cst_96 : f32 to vector<8x128xf32>
    %236 = arith.cmpf olt, %234, %235 : vector<8x128xf32>
    %cst_97 = arith.constant 4.000000e+00 : f32
    %237 = vector.broadcast %cst_97 : f32 to vector<8x128xf32>
    %238 = arith.addf %234, %237 : vector<8x128xf32>
    %239 = arith.select %236, %238, %234 : vector<8x128xi1>, vector<8x128xf32>
    %cst_98 = arith.constant 4.045000e-02 : f32
    %240 = vector.broadcast %cst_98 : f32 to vector<8x128xf32>
    %241 = arith.maximumf %20, %240 : vector<8x128xf32>
    %cst_99 = arith.constant 5.500000e-02 : f32
    %242 = vector.broadcast %cst_99 : f32 to vector<8x128xf32>
    %243 = arith.addf %241, %242 : vector<8x128xf32>
    %cst_100 = arith.constant 0.947867274 : f32
    %244 = vector.broadcast %cst_100 : f32 to vector<8x128xf32>
    %245 = arith.mulf %243, %244 : vector<8x128xf32>
    %246 = math.log %245 : vector<8x128xf32>
    %cst_101 = arith.constant 2.400000e+00 : f32
    %247 = vector.broadcast %cst_101 : f32 to vector<8x128xf32>
    %248 = arith.mulf %247, %246 : vector<8x128xf32>
    %249 = math.exp %248 : vector<8x128xf32>
    %cst_102 = arith.constant 4.045000e-02 : f32
    %250 = vector.broadcast %cst_102 : f32 to vector<8x128xf32>
    %251 = arith.cmpf olt, %20, %250 : vector<8x128xf32>
    %cst_103 = arith.constant 0.0773993805 : f32
    %252 = vector.broadcast %cst_103 : f32 to vector<8x128xf32>
    %253 = arith.mulf %20, %252 : vector<8x128xf32>
    %254 = arith.select %251, %253, %249 : vector<8x128xi1>, vector<8x128xf32>
    %cst_104 = arith.constant 4.045000e-02 : f32
    %255 = vector.broadcast %cst_104 : f32 to vector<8x128xf32>
    %256 = arith.maximumf %23, %255 : vector<8x128xf32>
    %cst_105 = arith.constant 5.500000e-02 : f32
    %257 = vector.broadcast %cst_105 : f32 to vector<8x128xf32>
    %258 = arith.addf %256, %257 : vector<8x128xf32>
    %cst_106 = arith.constant 0.947867274 : f32
    %259 = vector.broadcast %cst_106 : f32 to vector<8x128xf32>
    %260 = arith.mulf %258, %259 : vector<8x128xf32>
    %261 = math.log %260 : vector<8x128xf32>
    %cst_107 = arith.constant 2.400000e+00 : f32
    %262 = vector.broadcast %cst_107 : f32 to vector<8x128xf32>
    %263 = arith.mulf %262, %261 : vector<8x128xf32>
    %264 = math.exp %263 : vector<8x128xf32>
    %cst_108 = arith.constant 4.045000e-02 : f32
    %265 = vector.broadcast %cst_108 : f32 to vector<8x128xf32>
    %266 = arith.cmpf olt, %23, %265 : vector<8x128xf32>
    %cst_109 = arith.constant 0.0773993805 : f32
    %267 = vector.broadcast %cst_109 : f32 to vector<8x128xf32>
    %268 = arith.mulf %23, %267 : vector<8x128xf32>
    %269 = arith.select %266, %268, %264 : vector<8x128xi1>, vector<8x128xf32>
    %cst_110 = arith.constant 4.045000e-02 : f32
    %270 = vector.broadcast %cst_110 : f32 to vector<8x128xf32>
    %271 = arith.maximumf %26, %270 : vector<8x128xf32>
    %cst_111 = arith.constant 5.500000e-02 : f32
    %272 = vector.broadcast %cst_111 : f32 to vector<8x128xf32>
    %273 = arith.addf %271, %272 : vector<8x128xf32>
    %cst_112 = arith.constant 0.947867274 : f32
    %274 = vector.broadcast %cst_112 : f32 to vector<8x128xf32>
    %275 = arith.mulf %273, %274 : vector<8x128xf32>
    %276 = math.log %275 : vector<8x128xf32>
    %cst_113 = arith.constant 2.400000e+00 : f32
    %277 = vector.broadcast %cst_113 : f32 to vector<8x128xf32>
    %278 = arith.mulf %277, %276 : vector<8x128xf32>
    %279 = math.exp %278 : vector<8x128xf32>
    %cst_114 = arith.constant 4.045000e-02 : f32
    %280 = vector.broadcast %cst_114 : f32 to vector<8x128xf32>
    %281 = arith.cmpf olt, %26, %280 : vector<8x128xf32>
    %cst_115 = arith.constant 0.0773993805 : f32
    %282 = vector.broadcast %cst_115 : f32 to vector<8x128xf32>
    %283 = arith.mulf %26, %282 : vector<8x128xf32>
    %284 = arith.select %281, %283, %279 : vector<8x128xi1>, vector<8x128xf32>
    %cst_116 = arith.constant 0.433978319 : f32
    %285 = vector.broadcast %cst_116 : f32 to vector<8x128xf32>
    %286 = arith.mulf %285, %254 : vector<8x128xf32>
    %cst_117 = arith.constant 0.376241595 : f32
    %287 = vector.broadcast %cst_117 : f32 to vector<8x128xf32>
    %288 = arith.mulf %287, %269 : vector<8x128xf32>
    %289 = arith.addf %286, %288 : vector<8x128xf32>
    %cst_118 = arith.constant 0.18983902 : f32
    %290 = vector.broadcast %cst_118 : f32 to vector<8x128xf32>
    %291 = arith.mulf %290, %284 : vector<8x128xf32>
    %292 = arith.addf %289, %291 : vector<8x128xf32>
    %cst_119 = arith.constant 2.126710e-01 : f32
    %293 = vector.broadcast %cst_119 : f32 to vector<8x128xf32>
    %294 = arith.mulf %293, %254 : vector<8x128xf32>
    %cst_120 = arith.constant 7.151600e-01 : f32
    %295 = vector.broadcast %cst_120 : f32 to vector<8x128xf32>
    %296 = arith.mulf %295, %269 : vector<8x128xf32>
    %297 = arith.addf %294, %296 : vector<8x128xf32>
    %cst_121 = arith.constant 7.216900e-02 : f32
    %298 = vector.broadcast %cst_121 : f32 to vector<8x128xf32>
    %299 = arith.mulf %298, %284 : vector<8x128xf32>
    %300 = arith.addf %297, %299 : vector<8x128xf32>
    %cst_122 = arith.constant 0.0177571643 : f32
    %301 = vector.broadcast %cst_122 : f32 to vector<8x128xf32>
    %302 = arith.mulf %301, %254 : vector<8x128xf32>
    %cst_123 = arith.constant 0.109471895 : f32
    %303 = vector.broadcast %cst_123 : f32 to vector<8x128xf32>
    %304 = arith.mulf %303, %269 : vector<8x128xf32>
    %305 = arith.addf %302, %304 : vector<8x128xf32>
    %cst_124 = arith.constant 0.872728705 : f32
    %306 = vector.broadcast %cst_124 : f32 to vector<8x128xf32>
    %307 = arith.mulf %306, %284 : vector<8x128xf32>
    %308 = arith.addf %305, %307 : vector<8x128xf32>
    %cst_125 = arith.constant 8.856000e-03 : f32
    %309 = vector.broadcast %cst_125 : f32 to vector<8x128xf32>
    %310 = arith.maximumf %292, %309 : vector<8x128xf32>
    %311 = math.log %310 : vector<8x128xf32>
    %cst_126 = arith.constant 0.333333343 : f32
    %312 = vector.broadcast %cst_126 : f32 to vector<8x128xf32>
    %313 = arith.mulf %311, %312 : vector<8x128xf32>
    %314 = math.exp %313 : vector<8x128xf32>
    %cst_127 = arith.constant 8.856000e-03 : f32
    %315 = vector.broadcast %cst_127 : f32 to vector<8x128xf32>
    %316 = arith.cmpf ogt, %292, %315 : vector<8x128xf32>
    %cst_128 = arith.constant 903.299987 : f32
    %317 = vector.broadcast %cst_128 : f32 to vector<8x128xf32>
    %318 = arith.mulf %317, %292 : vector<8x128xf32>
    %cst_129 = arith.constant 1.600000e+01 : f32
    %319 = vector.broadcast %cst_129 : f32 to vector<8x128xf32>
    %320 = arith.addf %318, %319 : vector<8x128xf32>
    %cst_130 = arith.constant 8.620690e-03 : f32
    %321 = vector.broadcast %cst_130 : f32 to vector<8x128xf32>
    %322 = arith.mulf %320, %321 : vector<8x128xf32>
    %323 = arith.select %316, %314, %322 : vector<8x128xi1>, vector<8x128xf32>
    %cst_131 = arith.constant 8.856000e-03 : f32
    %324 = vector.broadcast %cst_131 : f32 to vector<8x128xf32>
    %325 = arith.maximumf %300, %324 : vector<8x128xf32>
    %326 = math.log %325 : vector<8x128xf32>
    %cst_132 = arith.constant 0.333333343 : f32
    %327 = vector.broadcast %cst_132 : f32 to vector<8x128xf32>
    %328 = arith.mulf %326, %327 : vector<8x128xf32>
    %329 = math.exp %328 : vector<8x128xf32>
    %cst_133 = arith.constant 8.856000e-03 : f32
    %330 = vector.broadcast %cst_133 : f32 to vector<8x128xf32>
    %331 = arith.cmpf ogt, %300, %330 : vector<8x128xf32>
    %cst_134 = arith.constant 903.299987 : f32
    %332 = vector.broadcast %cst_134 : f32 to vector<8x128xf32>
    %333 = arith.mulf %332, %300 : vector<8x128xf32>
    %cst_135 = arith.constant 1.600000e+01 : f32
    %334 = vector.broadcast %cst_135 : f32 to vector<8x128xf32>
    %335 = arith.addf %333, %334 : vector<8x128xf32>
    %cst_136 = arith.constant 8.620690e-03 : f32
    %336 = vector.broadcast %cst_136 : f32 to vector<8x128xf32>
    %337 = arith.mulf %335, %336 : vector<8x128xf32>
    %338 = arith.select %331, %329, %337 : vector<8x128xi1>, vector<8x128xf32>
    %cst_137 = arith.constant 8.856000e-03 : f32
    %339 = vector.broadcast %cst_137 : f32 to vector<8x128xf32>
    %340 = arith.maximumf %308, %339 : vector<8x128xf32>
    %341 = math.log %340 : vector<8x128xf32>
    %cst_138 = arith.constant 0.333333343 : f32
    %342 = vector.broadcast %cst_138 : f32 to vector<8x128xf32>
    %343 = arith.mulf %341, %342 : vector<8x128xf32>
    %344 = math.exp %343 : vector<8x128xf32>
    %cst_139 = arith.constant 8.856000e-03 : f32
    %345 = vector.broadcast %cst_139 : f32 to vector<8x128xf32>
    %346 = arith.cmpf ogt, %308, %345 : vector<8x128xf32>
    %cst_140 = arith.constant 903.299987 : f32
    %347 = vector.broadcast %cst_140 : f32 to vector<8x128xf32>
    %348 = arith.mulf %347, %308 : vector<8x128xf32>
    %cst_141 = arith.constant 1.600000e+01 : f32
    %349 = vector.broadcast %cst_141 : f32 to vector<8x128xf32>
    %350 = arith.addf %348, %349 : vector<8x128xf32>
    %cst_142 = arith.constant 8.620690e-03 : f32
    %351 = vector.broadcast %cst_142 : f32 to vector<8x128xf32>
    %352 = arith.mulf %350, %351 : vector<8x128xf32>
    %353 = arith.select %346, %344, %352 : vector<8x128xi1>, vector<8x128xf32>
    %cst_143 = arith.constant 1.160000e+02 : f32
    %354 = vector.broadcast %cst_143 : f32 to vector<8x128xf32>
    %355 = arith.mulf %354, %338 : vector<8x128xf32>
    %cst_144 = arith.constant 1.600000e+01 : f32
    %356 = vector.broadcast %cst_144 : f32 to vector<8x128xf32>
    %357 = arith.subf %355, %356 : vector<8x128xf32>
    %358 = arith.subf %323, %338 : vector<8x128xf32>
    %cst_145 = arith.constant 5.000000e+02 : f32
    %359 = vector.broadcast %cst_145 : f32 to vector<8x128xf32>
    %360 = arith.mulf %359, %358 : vector<8x128xf32>
    %361 = arith.subf %338, %353 : vector<8x128xf32>
    %cst_146 = arith.constant 2.000000e+02 : f32
    %362 = vector.broadcast %cst_146 : f32 to vector<8x128xf32>
    %363 = arith.mulf %362, %361 : vector<8x128xf32>
    %364 = arith.mulf %360, %360 : vector<8x128xf32>
    %365 = arith.mulf %363, %363 : vector<8x128xf32>
    %366 = arith.addf %364, %365 : vector<8x128xf32>
    %367 = math.sqrt %366 : vector<8x128xf32>
    %cst_147 = arith.constant 0.000000e+00 : f32
    %368 = vector.broadcast %cst_147 : f32 to vector<8x128xf32>
    %369 = arith.cmpf oeq, %360, %368 : vector<8x128xf32>
    %cst_148 = arith.constant 1.000000e+00 : f32
    %370 = vector.broadcast %cst_148 : f32 to vector<8x128xf32>
    %371 = arith.select %369, %370, %360 : vector<8x128xi1>, vector<8x128xf32>
    %372 = tpu.reciprocal %371 {approx = true} : vector<8x128xf32> -> vector<8x128xf32>
    %373 = arith.mulf %363, %372 : vector<8x128xf32>
    %cst_149 = arith.constant 0.000000e+00 : f32
    %374 = vector.broadcast %cst_149 : f32 to vector<8x128xf32>
    %375 = arith.cmpf olt, %373, %374 : vector<8x128xf32>
    %cst_150 = arith.constant 0.000000e+00 : f32
    %376 = vector.broadcast %cst_150 : f32 to vector<8x128xf32>
    %377 = arith.cmpf ogt, %373, %376 : vector<8x128xf32>
    %cst_151 = arith.constant 1.000000e+00 : f32
    %cst_152 = arith.constant 0.000000e+00 : f32
    %378 = vector.broadcast %cst_151 : f32 to vector<8x128xf32>
    %379 = vector.broadcast %cst_152 : f32 to vector<8x128xf32>
    %380 = arith.select %377, %378, %379 : vector<8x128xi1>, vector<8x128xf32>
    %cst_153 = arith.constant -1.000000e+00 : f32
    %381 = vector.broadcast %cst_153 : f32 to vector<8x128xf32>
    %382 = arith.select %375, %381, %380 : vector<8x128xi1>, vector<8x128xf32>
    %383 = math.absf %373 : vector<8x128xf32>
    %cst_154 = arith.constant 2.41421366 : f32
    %384 = vector.broadcast %cst_154 : f32 to vector<8x128xf32>
    %385 = arith.cmpf ogt, %383, %384 : vector<8x128xf32>
    %cst_155 = arith.constant 0.414213568 : f32
    %386 = vector.broadcast %cst_155 : f32 to vector<8x128xf32>
    %387 = arith.cmpf ogt, %383, %386 : vector<8x128xf32>
    %cst_156 = arith.constant dense<true> : vector<8x128xi1>
    %388 = arith.xori %385, %cst_156 : vector<8x128xi1>
    %389 = arith.andi %387, %388 : vector<8x128xi1>
    %cst_157 = arith.constant 1.000000e+00 : f32
    %390 = vector.broadcast %cst_157 : f32 to vector<8x128xf32>
    %391 = arith.select %385, %383, %390 : vector<8x128xi1>, vector<8x128xf32>
    %392 = tpu.reciprocal %391 {approx = true} : vector<8x128xf32> -> vector<8x128xf32>
    %cst_158 = arith.constant 0.000000e+00 : f32
    %393 = vector.broadcast %cst_158 : f32 to vector<8x128xf32>
    %394 = arith.subf %393, %392 : vector<8x128xf32>
    %cst_159 = arith.constant 1.000000e+00 : f32
    %395 = vector.broadcast %cst_159 : f32 to vector<8x128xf32>
    %396 = arith.subf %383, %395 : vector<8x128xf32>
    %cst_160 = arith.constant 1.000000e+00 : f32
    %397 = vector.broadcast %cst_160 : f32 to vector<8x128xf32>
    %398 = arith.addf %383, %397 : vector<8x128xf32>
    %399 = tpu.reciprocal %398 {approx = true} : vector<8x128xf32> -> vector<8x128xf32>
    %400 = arith.mulf %396, %399 : vector<8x128xf32>
    %401 = arith.select %389, %400, %383 : vector<8x128xi1>, vector<8x128xf32>
    %402 = arith.select %385, %394, %401 : vector<8x128xi1>, vector<8x128xf32>
    %cst_161 = arith.constant 0.785398185 : f32
    %cst_162 = arith.constant 0.000000e+00 : f32
    %403 = vector.broadcast %cst_161 : f32 to vector<8x128xf32>
    %404 = vector.broadcast %cst_162 : f32 to vector<8x128xf32>
    %405 = arith.select %389, %403, %404 : vector<8x128xi1>, vector<8x128xf32>
    %cst_163 = arith.constant 1.57079637 : f32
    %406 = vector.broadcast %cst_163 : f32 to vector<8x128xf32>
    %407 = arith.select %385, %406, %405 : vector<8x128xi1>, vector<8x128xf32>
    %408 = arith.mulf %402, %402 : vector<8x128xf32>
    %cst_164 = arith.constant 0.0805374458 : f32
    %409 = vector.broadcast %cst_164 : f32 to vector<8x128xf32>
    %410 = arith.mulf %409, %408 : vector<8x128xf32>
    %cst_165 = arith.constant 0.138776854 : f32
    %411 = vector.broadcast %cst_165 : f32 to vector<8x128xf32>
    %412 = arith.subf %410, %411 : vector<8x128xf32>
    %413 = arith.mulf %412, %408 : vector<8x128xf32>
    %cst_166 = arith.constant 0.199777111 : f32
    %414 = vector.broadcast %cst_166 : f32 to vector<8x128xf32>
    %415 = arith.addf %413, %414 : vector<8x128xf32>
    %416 = arith.mulf %415, %408 : vector<8x128xf32>
    %cst_167 = arith.constant 0.333329499 : f32
    %417 = vector.broadcast %cst_167 : f32 to vector<8x128xf32>
    %418 = arith.subf %416, %417 : vector<8x128xf32>
    %419 = arith.mulf %418, %408 : vector<8x128xf32>
    %420 = arith.mulf %419, %402 : vector<8x128xf32>
    %421 = arith.addf %420, %402 : vector<8x128xf32>
    %422 = arith.addf %407, %421 : vector<8x128xf32>
    %423 = arith.mulf %382, %422 : vector<8x128xf32>
    %cst_168 = arith.constant 0.000000e+00 : f32
    %424 = vector.broadcast %cst_168 : f32 to vector<8x128xf32>
    %425 = arith.cmpf ogt, %360, %424 : vector<8x128xf32>
    %cst_169 = arith.constant 0.000000e+00 : f32
    %426 = vector.broadcast %cst_169 : f32 to vector<8x128xf32>
    %427 = arith.cmpf oge, %363, %426 : vector<8x128xf32>
    %cst_170 = arith.constant 3.14159274 : f32
    %428 = vector.broadcast %cst_170 : f32 to vector<8x128xf32>
    %429 = arith.addf %423, %428 : vector<8x128xf32>
    %cst_171 = arith.constant 3.14159274 : f32
    %430 = vector.broadcast %cst_171 : f32 to vector<8x128xf32>
    %431 = arith.subf %423, %430 : vector<8x128xf32>
    %432 = arith.select %427, %429, %431 : vector<8x128xi1>, vector<8x128xf32>
    %433 = arith.select %425, %423, %432 : vector<8x128xi1>, vector<8x128xf32>
    %cst_172 = arith.constant 0.000000e+00 : f32
    %434 = vector.broadcast %cst_172 : f32 to vector<8x128xf32>
    %435 = arith.cmpf oeq, %360, %434 : vector<8x128xf32>
    %cst_173 = arith.constant 0.000000e+00 : f32
    %436 = vector.broadcast %cst_173 : f32 to vector<8x128xf32>
    %437 = arith.cmpf ogt, %363, %436 : vector<8x128xf32>
    %cst_174 = arith.constant 0.000000e+00 : f32
    %438 = vector.broadcast %cst_174 : f32 to vector<8x128xf32>
    %439 = arith.cmpf olt, %363, %438 : vector<8x128xf32>
    %cst_175 = arith.constant -1.57079637 : f32
    %cst_176 = arith.constant 0.000000e+00 : f32
    %440 = vector.broadcast %cst_175 : f32 to vector<8x128xf32>
    %441 = vector.broadcast %cst_176 : f32 to vector<8x128xf32>
    %442 = arith.select %439, %440, %441 : vector<8x128xi1>, vector<8x128xf32>
    %cst_177 = arith.constant 1.57079637 : f32
    %443 = vector.broadcast %cst_177 : f32 to vector<8x128xf32>
    %444 = arith.select %437, %443, %442 : vector<8x128xi1>, vector<8x128xf32>
    %445 = arith.select %435, %444, %433 : vector<8x128xi1>, vector<8x128xf32>
    %cst_178 = arith.constant 0.636619746 : f32
    %446 = vector.broadcast %cst_178 : f32 to vector<8x128xf32>
    %447 = arith.mulf %445, %446 : vector<8x128xf32>
    %cst_179 = arith.constant 0.000000e+00 : f32
    %448 = vector.broadcast %cst_179 : f32 to vector<8x128xf32>
    %449 = arith.cmpf olt, %447, %448 : vector<8x128xf32>
    %cst_180 = arith.constant 4.000000e+00 : f32
    %450 = vector.broadcast %cst_180 : f32 to vector<8x128xf32>
    %451 = arith.addf %447, %450 : vector<8x128xf32>
    %452 = arith.select %449, %451, %447 : vector<8x128xi1>, vector<8x128xf32>
    %453 = arith.subf %144, %357 : vector<8x128xf32>
    %454 = math.absf %453 : vector<8x128xf32>
    %455 = arith.subf %154, %367 : vector<8x128xf32>
    %456 = math.absf %455 : vector<8x128xf32>
    %cst_181 = arith.constant 3.000000e+00 : f32
    %457 = vector.broadcast %cst_181 : f32 to vector<8x128xf32>
    %458 = arith.subf %239, %457 : vector<8x128xf32>
    %459 = math.absf %458 : vector<8x128xf32>
    %cst_182 = arith.constant 1.000000e+00 : f32
    %460 = vector.broadcast %cst_182 : f32 to vector<8x128xf32>
    %461 = arith.subf %460, %459 : vector<8x128xf32>
    %cst_183 = arith.constant 0.000000e+00 : f32
    %462 = vector.broadcast %cst_183 : f32 to vector<8x128xf32>
    %463 = arith.maximumf %461, %462 : vector<8x128xf32>
    %cst_184 = arith.constant 3.000000e+00 : f32
    %464 = vector.broadcast %cst_184 : f32 to vector<8x128xf32>
    %465 = arith.subf %452, %464 : vector<8x128xf32>
    %466 = math.absf %465 : vector<8x128xf32>
    %cst_185 = arith.constant 1.000000e+00 : f32
    %467 = vector.broadcast %cst_185 : f32 to vector<8x128xf32>
    %468 = arith.subf %467, %466 : vector<8x128xf32>
    %cst_186 = arith.constant 0.000000e+00 : f32
    %469 = vector.broadcast %cst_186 : f32 to vector<8x128xf32>
    %470 = arith.maximumf %468, %469 : vector<8x128xf32>
    %cst_187 = arith.constant 0.000000e+00 : f32
    %471 = vector.broadcast %cst_187 : f32 to vector<8x128xf32>
    %472 = arith.subf %239, %471 : vector<8x128xf32>
    %473 = math.absf %472 : vector<8x128xf32>
    %cst_188 = arith.constant 1.000000e+00 : f32
    %474 = vector.broadcast %cst_188 : f32 to vector<8x128xf32>
    %475 = arith.subf %474, %473 : vector<8x128xf32>
    %cst_189 = arith.constant 0.000000e+00 : f32
    %476 = vector.broadcast %cst_189 : f32 to vector<8x128xf32>
    %477 = arith.maximumf %475, %476 : vector<8x128xf32>
    %cst_190 = arith.constant 0.000000e+00 : f32
    %478 = vector.broadcast %cst_190 : f32 to vector<8x128xf32>
    %479 = arith.subf %452, %478 : vector<8x128xf32>
    %480 = math.absf %479 : vector<8x128xf32>
    %cst_191 = arith.constant 1.000000e+00 : f32
    %481 = vector.broadcast %cst_191 : f32 to vector<8x128xf32>
    %482 = arith.subf %481, %480 : vector<8x128xf32>
    %cst_192 = arith.constant 0.000000e+00 : f32
    %483 = vector.broadcast %cst_192 : f32 to vector<8x128xf32>
    %484 = arith.maximumf %482, %483 : vector<8x128xf32>
    %485 = arith.addf %477, %463 : vector<8x128xf32>
    %486 = arith.addf %484, %470 : vector<8x128xf32>
    %cst_193 = arith.constant 1.000000e-03 : f32
    %cst_194 = arith.constant 9.990000e-01 : f32
    %487 = vector.broadcast %cst_193 : f32 to vector<8x128xf32>
    %488 = arith.maximumf %487, %486 : vector<8x128xf32>
    %489 = vector.broadcast %cst_194 : f32 to vector<8x128xf32>
    %490 = arith.minimumf %489, %488 : vector<8x128xf32>
    %cst_195 = arith.constant 0.00999999977 : f32
    %491 = vector.broadcast %cst_195 : f32 to vector<8x128xf32>
    %492 = arith.addf %485, %491 : vector<8x128xf32>
    %493 = math.log %492 : vector<8x128xf32>
    %494 = arith.mulf %490, %493 : vector<8x128xf32>
    %cst_196 = arith.constant 1.000000e+00 : f32
    %495 = vector.broadcast %cst_196 : f32 to vector<8x128xf32>
    %496 = arith.subf %239, %495 : vector<8x128xf32>
    %497 = math.absf %496 : vector<8x128xf32>
    %cst_197 = arith.constant 1.000000e+00 : f32
    %498 = vector.broadcast %cst_197 : f32 to vector<8x128xf32>
    %499 = arith.subf %498, %497 : vector<8x128xf32>
    %cst_198 = arith.constant 0.000000e+00 : f32
    %500 = vector.broadcast %cst_198 : f32 to vector<8x128xf32>
    %501 = arith.maximumf %499, %500 : vector<8x128xf32>
    %cst_199 = arith.constant 1.000000e+00 : f32
    %502 = vector.broadcast %cst_199 : f32 to vector<8x128xf32>
    %503 = arith.subf %452, %502 : vector<8x128xf32>
    %504 = math.absf %503 : vector<8x128xf32>
    %cst_200 = arith.constant 1.000000e+00 : f32
    %505 = vector.broadcast %cst_200 : f32 to vector<8x128xf32>
    %506 = arith.subf %505, %504 : vector<8x128xf32>
    %cst_201 = arith.constant 0.000000e+00 : f32
    %507 = vector.broadcast %cst_201 : f32 to vector<8x128xf32>
    %508 = arith.maximumf %506, %507 : vector<8x128xf32>
    %cst_202 = arith.constant 1.000000e-03 : f32
    %cst_203 = arith.constant 9.990000e-01 : f32
    %509 = vector.broadcast %cst_202 : f32 to vector<8x128xf32>
    %510 = arith.maximumf %509, %508 : vector<8x128xf32>
    %511 = vector.broadcast %cst_203 : f32 to vector<8x128xf32>
    %512 = arith.minimumf %511, %510 : vector<8x128xf32>
    %cst_204 = arith.constant 0.00999999977 : f32
    %513 = vector.broadcast %cst_204 : f32 to vector<8x128xf32>
    %514 = arith.addf %501, %513 : vector<8x128xf32>
    %515 = math.log %514 : vector<8x128xf32>
    %516 = arith.mulf %512, %515 : vector<8x128xf32>
    %517 = arith.addf %490, %512 : vector<8x128xf32>
    %518 = arith.addf %494, %516 : vector<8x128xf32>
    %cst_205 = arith.constant 2.000000e+00 : f32
    %519 = vector.broadcast %cst_205 : f32 to vector<8x128xf32>
    %520 = arith.subf %239, %519 : vector<8x128xf32>
    %521 = math.absf %520 : vector<8x128xf32>
    %cst_206 = arith.constant 1.000000e+00 : f32
    %522 = vector.broadcast %cst_206 : f32 to vector<8x128xf32>
    %523 = arith.subf %522, %521 : vector<8x128xf32>
    %cst_207 = arith.constant 0.000000e+00 : f32
    %524 = vector.broadcast %cst_207 : f32 to vector<8x128xf32>
    %525 = arith.maximumf %523, %524 : vector<8x128xf32>
    %cst_208 = arith.constant 2.000000e+00 : f32
    %526 = vector.broadcast %cst_208 : f32 to vector<8x128xf32>
    %527 = arith.subf %452, %526 : vector<8x128xf32>
    %528 = math.absf %527 : vector<8x128xf32>
    %cst_209 = arith.constant 1.000000e+00 : f32
    %529 = vector.broadcast %cst_209 : f32 to vector<8x128xf32>
    %530 = arith.subf %529, %528 : vector<8x128xf32>
    %cst_210 = arith.constant 0.000000e+00 : f32
    %531 = vector.broadcast %cst_210 : f32 to vector<8x128xf32>
    %532 = arith.maximumf %530, %531 : vector<8x128xf32>
    %cst_211 = arith.constant 1.000000e-03 : f32
    %cst_212 = arith.constant 9.990000e-01 : f32
    %533 = vector.broadcast %cst_211 : f32 to vector<8x128xf32>
    %534 = arith.maximumf %533, %532 : vector<8x128xf32>
    %535 = vector.broadcast %cst_212 : f32 to vector<8x128xf32>
    %536 = arith.minimumf %535, %534 : vector<8x128xf32>
    %cst_213 = arith.constant 0.00999999977 : f32
    %537 = vector.broadcast %cst_213 : f32 to vector<8x128xf32>
    %538 = arith.addf %525, %537 : vector<8x128xf32>
    %539 = math.log %538 : vector<8x128xf32>
    %540 = arith.mulf %536, %539 : vector<8x128xf32>
    %541 = arith.addf %517, %536 : vector<8x128xf32>
    %542 = arith.addf %518, %540 : vector<8x128xf32>
    %cst_214 = arith.constant 1.000000e-03 : f32
    %cst_215 = arith.constant 9.990000e-01 : f32
    %543 = vector.broadcast %cst_214 : f32 to vector<8x128xf32>
    %544 = arith.maximumf %543, %470 : vector<8x128xf32>
    %545 = vector.broadcast %cst_215 : f32 to vector<8x128xf32>
    %546 = arith.minimumf %545, %544 : vector<8x128xf32>
    %cst_216 = arith.constant 0.00999999977 : f32
    %547 = vector.broadcast %cst_216 : f32 to vector<8x128xf32>
    %548 = arith.addf %463, %547 : vector<8x128xf32>
    %549 = math.log %548 : vector<8x128xf32>
    %550 = arith.mulf %546, %549 : vector<8x128xf32>
    %551 = arith.addf %541, %546 : vector<8x128xf32>
    %552 = arith.addf %542, %550 : vector<8x128xf32>
    %cst_217 = arith.constant -0.0392207131 : f32
    %553 = vector.broadcast %cst_217 : f32 to vector<8x128xf32>
    %554 = arith.mulf %551, %553 : vector<8x128xf32>
    %555 = arith.addf %552, %554 : vector<8x128xf32>
    %cst_218 = arith.constant 0.000000e+00 : f32
    %556 = vector.broadcast %cst_218 : f32 to vector<8x128xf32>
    %557 = arith.subf %556, %555 : vector<8x128xf32>
    %c128_i32_219 = arith.constant 128 : i32
    %558 = arith.muli %8, %c128_i32_219 : i32
    %559 = arith.addi %5, %558 : i32
    %560 = vector.broadcast %559 : i32 to vector<8x128xi32>
    %561 = arith.addi %4, %560 : vector<8x128xi32>
    %c256_i32 = arith.constant 256 : i32
    %562 = vector.broadcast %c256_i32 : i32 to vector<8x128xi32>
    %563 = arith.cmpi slt, %561, %562 : vector<8x128xi32>
    %cst_220 = arith.constant 0.000000e+00 : f32
    %564 = vector.broadcast %cst_220 : f32 to vector<8x128xf32>
    %565 = arith.select %563, %557, %564 : vector<8x128xi1>, vector<8x128xf32>
    %566 = arith.addf %6, %454 : vector<8x128xf32>
    %567 = arith.addf %6, %456 : vector<8x128xf32>
    %568 = arith.addf %6, %565 : vector<8x128xf32>
    %c1_i32 = arith.constant 1 : i32
    %c0_221 = arith.constant 0 : index
    %c0_222 = arith.constant 0 : index
    %c0_223 = arith.constant 0 : index
    %c0_224 = arith.constant 0 : index
    %c0_225 = arith.constant 0 : index
    %569 = vector.load %arg4[%c0_221, %c0_222, %c0_223, %c0_224, %c0_225] : memref<1x1x3x8x128xf32, #tpu.memory_space<vmem>>, vector<1x1x1x8x128xf32>
    %570 = vector.shape_cast %569 : vector<1x1x1x8x128xf32> to vector<8x128xf32>
    %571 = vector.shape_cast %566 : vector<8x128xf32> to vector<1x1x1x8x128xf32>
    tpu.vector_store %arg4[%c0_221, %c0_222, %c0_223, %c0_224, %c0_225], %571 {strides = array<i32>} : memref<1x1x3x8x128xf32, #tpu.memory_space<vmem>>, vector<1x1x1x8x128xf32>,
    %c0_226 = arith.constant 0 : index
    %c0_227 = arith.constant 0 : index
    %c1_228 = arith.constant 1 : index
    %c0_229 = arith.constant 0 : index
    %c0_230 = arith.constant 0 : index
    %572 = vector.load %arg4[%c0_226, %c0_227, %c1_228, %c0_229, %c0_230] : memref<1x1x3x8x128xf32, #tpu.memory_space<vmem>>, vector<1x1x1x8x128xf32>
    %573 = vector.shape_cast %572 : vector<1x1x1x8x128xf32> to vector<8x128xf32>
    %574 = vector.shape_cast %567 : vector<8x128xf32> to vector<1x1x1x8x128xf32>
    tpu.vector_store %arg4[%c0_226, %c0_227, %c1_228, %c0_229, %c0_230], %574 {strides = array<i32>} : memref<1x1x3x8x128xf32, #tpu.memory_space<vmem>>, vector<1x1x1x8x128xf32>,
    %c0_231 = arith.constant 0 : index
    %c0_232 = arith.constant 0 : index
    %c2_233 = arith.constant 2 : index
    %c0_234 = arith.constant 0 : index
    %c0_235 = arith.constant 0 : index
    %575 = vector.load %arg4[%c0_231, %c0_232, %c2_233, %c0_234, %c0_235] : memref<1x1x3x8x128xf32, #tpu.memory_space<vmem>>, vector<1x1x1x8x128xf32>
    %576 = vector.shape_cast %575 : vector<1x1x1x8x128xf32> to vector<8x128xf32>
    %577 = vector.shape_cast %568 : vector<8x128xf32> to vector<1x1x1x8x128xf32>
    tpu.vector_store %arg4[%c0_231, %c0_232, %c2_233, %c0_234, %c0_235], %577 {strides = array<i32>} : memref<1x1x3x8x128xf32, #tpu.memory_space<vmem>>, vector<1x1x1x8x128xf32>,
    return
  }
  func.func @transform_0(%arg0: i32, %arg1: i32) -> (i32, i32, i32, i32) {
    %c0_i32 = arith.constant 0 : i32
    %c0_i32_0 = arith.constant 0 : i32
    %c0_i32_1 = arith.constant 0 : i32
    return %arg0, %c0_i32, %arg1, %c0_i32_0 : i32, i32, i32, i32
  }
  func.func @transform_1(%arg0: i32, %arg1: i32) -> (i32, i32, i32, i32) {
    %c0_i32 = arith.constant 0 : i32
    %c0_i32_0 = arith.constant 0 : i32
    %c0_i32_1 = arith.constant 0 : i32
    return %arg0, %c0_i32, %arg1, %c0_i32_0 : i32, i32, i32, i32
  }
  func.func @transform_2(%arg0: i32, %arg1: i32) -> (i32, i32, i32, i32, i32) {
    %c0_i32 = arith.constant 0 : i32
    %c0_i32_0 = arith.constant 0 : i32
    %c0_i32_1 = arith.constant 0 : i32
    %c0_i32_2 = arith.constant 0 : i32
    return %arg0, %arg1, %c0_i32, %c0_i32_0, %c0_i32_1 : i32, i32, i32, i32, i32
  }
}

</mosaic_0001>

<llo_original>
// kernel: tpu_custom_call.1
$region0: #{tpu_custom_call.1}
  #allocation0 [shape = 'u32[]', space=smem, size = 0x4, offset = 0x4, fixed_abs, tag = 'smem constant byte address 0x4 - core index']
  #allocation1 [shape = 'u32[144,128]{1,0:T(1,128)}', space=vmem, size = 0x12000, scoped, tag = 'internal scratch']
  %s0 = inlined_call_operand.hbm [shape: f32[2,3,8,128], index: 0, kind: input, shape index: {}]
  %s1 = inlined_call_operand.hbm [shape: f32[2,3,8,128], index: 1, kind: input, shape index: {}]
  %s2 = inlined_call_operand.hbm [shape: f32[2,1,3,8,128], index: 2, kind: output, shape index: {}]
  %s3 = sld [smem:[#allocation0]]
  $region49: #{tpu_custom_call.1} parent=0
    _
  %s5 = ssub.s32 1, %s3
  %s6 = scalar_select 0, %s5, %s3
  $region1: #{tpu_custom_call.1} parent=0
    #allocation2 [shape = 'u8[24576]{0}', space=vmem, size = 0x6000, scoped, tag = 'input window, operand 0']
    #allocation3 [shape = 's32[2]{0}', space=sflag, size = 0x8, scoped, tag = 'scoped memory for tpu_custom_call.1']
    #allocation4 [shape = 's32[2]{0}', space=sflag, size = 0x8, scoped, tag = 'scoped memory for tpu_custom_call.1']
    #allocation5 [shape = 'u8[24576]{0}', space=vmem, size = 0x6000, scoped, tag = 'input window, operand 1']
    #allocation6 [shape = 's32[2]{0}', space=sflag, size = 0x8, scoped, tag = 'scoped memory for tpu_custom_call.1']
    #allocation7 [shape = 'u8[24576]{0}', space=vmem, size = 0x6000, scoped, tag = 'output window, operand 0']
    %7 = vsyncpa [#allocation3], 0
    %s8 = scalar_lea.sflag [#allocation3], 1
    %9 = vsyncpa %s8, 0
    %10 = vsyncpa [#allocation6], 0
    %s11 = scalar_lea.sflag [#allocation6], 1
    %12 = vsyncpa %s11, 0
    %13 = vsyncpa [#allocation4], 0
    %s14 = scalar_lea.sflag [#allocation4], 1
    %15 = vsyncpa %s14, 0
    loop: start=0, step=1, limit=4
    $region2: #{tpu_custom_call.1} parent=1 // loop_pre_header
      _
    $region3: #{tpu_custom_call.1} parent=1 // loop_header
      %s17 = sphi 0, %s21
      %p18 = scmp.ge.s32.totalorder %s17, 4
      %s24 = sphi 0, %s36
      %s25 = sphi 0, %s32
      %s26 = sphi 0, %s24
      %s27 = sphi 0, %s25
      %s28 = sphi 0, %s26
      %s29 = sphi 0, %s27
      %s41 = sphi 0, %s43
      %s44 = sphi 0, %s41
      %s45 = sphi 0, %s44
      %s61 = sphi 0, %s45
      %s69 = sphi 0, %s71
      %s72 = sphi 0, %s69
      %s73 = sphi 0, %s72
      %s89 = sphi 0, %s73
      %s97 = sphi 0, %s99
      %s100 = sphi 0, %s97
      %s101 = sphi 0, %s100
      %s117 = sphi 0, %s101
    $region4: #{tpu_custom_call.1} parent=1 // loop_header_branch
      %20 = sbr.rel (%p18) target = $region8
    $region5: #{tpu_custom_call.1} parent=1 // loop_body
      %s22 = ssub.s32 %s17, 1
      %s23 = ssub.s32 %s17, 2
      %s30 = sadd.s32 1, %s25
      %p31 = scmp.ge.s32.totalorder %s30, 1
      %s32 = scalar_select %p31, 0, %s30
      %s33 = sadd.s32 1, %s24
      %s34 = scalar_select %p31, %s33, %s24
      %p35 = scmp.ge.s32.totalorder %s34, 2
      %s36 = scalar_select %p35, 0, %s34
      %s37 = ssub.s32 %s24, %s36
      %s38 = ssub.s32 %s25, %s32
      %s39 = sor.u32 %s37, %s38
      %p40 = scmp.eq.s32.totalorder %s39, 0
      %s42 = sadd.s32 %s41, 1
      %s43 = scalar_select %p40, %s41, %s42
      %p46 = pneg %p40
      %p47 = scmp.eq.s32.totalorder %s17, 1
      %p48 = por %p46, %p47
      %p49 = scmp.ne.s32.totalorder %s41, %s44
      %p50 = scmp.eq.s32.totalorder %s17, 0
      %p51 = por %p49, %p50
      %p52 = scmp.ne.s32.totalorder %s41, %s44
      %p53 = scmp.eq.s32.totalorder %s22, 1
      %p54 = por %p52, %p53
      %p55 = scmp.ne.s32.totalorder %s44, %s45
      %p56 = scmp.eq.s32.totalorder %s22, 0
      %p57 = por %p55, %p56
      %p58 = scmp.ne.s32.totalorder %s44, %s45
      %p59 = scmp.eq.s32.totalorder %s23, 1
      %p60 = por %p58, %p59
      %p62 = scmp.ne.s32.totalorder %s45, %s61
      %p63 = scmp.eq.s32.totalorder %s23, 0
      %p64 = por %p62, %p63
      %s65 = ssub.s32 %s24, %s36
      %s66 = ssub.s32 %s25, %s32
      %s67 = sor.u32 %s65, %s66
      %p68 = scmp.eq.s32.totalorder %s67, 0
      %s70 = sadd.s32 %s69, 1
      %s71 = scalar_select %p68, %s69, %s70
      %p74 = pneg %p68
      %p75 = scmp.eq.s32.totalorder %s17, 1
      %p76 = por %p74, %p75
      %p77 = scmp.ne.s32.totalorder %s69, %s72
      %p78 = scmp.eq.s32.totalorder %s17, 0
      %p79 = por %p77, %p78
      %p80 = scmp.ne.s32.totalorder %s69, %s72
      %p81 = scmp.eq.s32.totalorder %s22, 1
      %p82 = por %p80, %p81
      %p83 = scmp.ne.s32.totalorder %s72, %s73
      %p84 = scmp.eq.s32.totalorder %s22, 0
      %p85 = por %p83, %p84
      %p86 = scmp.ne.s32.totalorder %s72, %s73
      %p87 = scmp.eq.s32.totalorder %s23, 1
      %p88 = por %p86, %p87
      %p90 = scmp.ne.s32.totalorder %s73, %s89
      %p91 = scmp.eq.s32.totalorder %s23, 0
      %p92 = por %p90, %p91
      %s93 = ssub.s32 %s24, %s36
      %s94 = ssub.s32 %s25, %s32
      %s95 = sor.u32 %s93, %s94
      %p96 = scmp.eq.s32.totalorder %s95, 0
      %s98 = sadd.s32 %s97, 1
      %s99 = scalar_select %p96, %s97, %s98
      %p102 = pneg %p96
      %p103 = scmp.eq.s32.totalorder %s17, 1
      %p104 = por %p102, %p103
      %p105 = scmp.ne.s32.totalorder %s97, %s100
      %p106 = scmp.eq.s32.totalorder %s17, 0
      %p107 = por %p105, %p106
      %p108 = scmp.ne.s32.totalorder %s97, %s100
      %p109 = scmp.eq.s32.totalorder %s22, 1
      %p110 = por %p108, %p109
      %p111 = scmp.ne.s32.totalorder %s100, %s101
      %p112 = scmp.eq.s32.totalorder %s22, 0
      %p113 = por %p111, %p112
      %p114 = scmp.ne.s32.totalorder %s100, %s101
      %p115 = scmp.eq.s32.totalorder %s23, 1
      %p116 = por %p114, %p115
      %p118 = scmp.ne.s32.totalorder %s101, %s117
      %p119 = scmp.eq.s32.totalorder %s23, 0
      %p120 = por %p118, %p119
      %p121 = scmp.le.s32.totalorder 1, %s17
      %p122 = scmp.lt.s32.totalorder %s17, 3
      %p123 = pnand %p121, %p122
      %p124 = pneg %p123
      // Predicated region
      $region9: #{tpu_custom_call.1} parent=5 // pred_check
        _
      $region10: #{tpu_custom_call.1} parent=5 // pred_check_branch
        %126 = sbr.rel (%p123) target = $region12
      $region11: #{tpu_custom_call.1} parent=5 // pred_region
        %s127 = ssub.s32 %s17, 1
      $region12: #{tpu_custom_call.1} parent=5 // pred_fallthru
        _
      %p128 = scmp.lt.s32.totalorder %s17, 2
      // Predicated region
      $region13: #{tpu_custom_call.1} parent=5 // pred_check
        %p129 = pneg %p128
      $region14: #{tpu_custom_call.1} parent=5 // pred_check_branch
        %131 = sbr.rel (%p129) target = $region16
      $region15: #{tpu_custom_call.1} parent=5 // pred_region
        // Predicated region
        $region17: #{tpu_custom_call.1} parent=15 // pred_check
          %p132 = pneg %p51
        $region18: #{tpu_custom_call.1} parent=15 // pred_check_branch
          %134 = sbr.rel (%p132) target = $region20
        $region19: #{tpu_custom_call.1} parent=15 // pred_region
          %s135 = sand.u32 %s41, 1
          %s136 = scalar_lea.sflag [#allocation3], %s135
          %s137 = sand.u32 %s41, 1
          %s138 = smul.addr %s137, 24
          %s139 = scalar_lea.vmem [#allocation2], %s138
          %s141 = ssub.s32 384, 384
          %142 = vsyncadd %s136, %s141
          %s143 = smul.addr %s24, 3
          %s144 = sadd.s32 %s25, %s143
          %s145 = smul.addr %s144, 128
          %s146 = scalar_lea.hbm %s0, %s145
          %s147 = sshll.u32 %s139, 4
          %s148 = int_to_ptr.vmem [resolvable:$true] %s147
          %153 = dma.hbm_to_vmem [thread:$0]  %s146, 384, %s148, %s136, 128, 128, 8
        $region20: #{tpu_custom_call.1} parent=15 // pred_fallthru
          _
        // Predicated region
        $region21: #{tpu_custom_call.1} parent=15 // pred_check
          %p154 = pneg %p79
        $region22: #{tpu_custom_call.1} parent=15 // pred_check_branch
          %156 = sbr.rel (%p154) target = $region24
        $region23: #{tpu_custom_call.1} parent=15 // pred_region
          %s157 = sand.u32 %s69, 1
          %s158 = scalar_lea.sflag [#allocation6], %s157
          %s159 = sand.u32 %s69, 1
          %s160 = smul.addr %s159, 24
          %s161 = scalar_lea.vmem [#allocation5], %s160
          %s163 = ssub.s32 384, 384
          %164 = vsyncadd %s158, %s163
          %s165 = smul.addr %s24, 3
          %s166 = sadd.s32 %s25, %s165
          %s167 = smul.addr %s166, 128
          %s168 = scalar_lea.hbm %s1, %s167
          %s169 = sshll.u32 %s161, 4
          %s170 = int_to_ptr.vmem [resolvable:$true] %s169
          %175 = dma.hbm_to_vmem [thread:$0]  %s168, 384, %s170, %s158, 128, 128, 8
        $region24: #{tpu_custom_call.1} parent=15 // pred_fallthru
          _
      $region16: #{tpu_custom_call.1} parent=5 // pred_fallthru
        _
      %p176 = scmp.le.s32.totalorder 1, %s17
      %p177 = scmp.lt.s32.totalorder %s17, 3
      %p178 = pnand %p176, %p177
      %p179 = pneg %p178
      // Predicated region
      $region25: #{tpu_custom_call.1} parent=5 // pred_check
        _
      $region26: #{tpu_custom_call.1} parent=5 // pred_check_branch
        %181 = sbr.rel (%p178) target = $region28
      $region27: #{tpu_custom_call.1} parent=5 // pred_region
        %s182 = ssub.s32 %s17, 1
        %s183 = sand.u32 %s44, 1
        %s184 = scalar_lea.sflag [#allocation3], %s183
        %s185 = sand.u32 %s44, 1
        %s186 = smul.addr %s185, 24
        %s187 = scalar_lea.vmem [#allocation2], %s186
        // Predicated region
        $region29: #{tpu_custom_call.1} parent=27 // pred_check
          %p188 = pneg %p57
        $region30: #{tpu_custom_call.1} parent=27 // pred_check_branch
          %190 = sbr.rel (%p188) target = $region32
        $region31: #{tpu_custom_call.1} parent=27 // pred_region
          %191 = dma.done %s184, 384
        $region32: #{tpu_custom_call.1} parent=27 // pred_fallthru
          _
        %s192 = sand.u32 %s72, 1
        %s193 = scalar_lea.sflag [#allocation6], %s192
        %s194 = sand.u32 %s72, 1
        %s195 = smul.addr %s194, 24
        %s196 = scalar_lea.vmem [#allocation5], %s195
        // Predicated region
        $region33: #{tpu_custom_call.1} parent=27 // pred_check
          %p197 = pneg %p85
        $region34: #{tpu_custom_call.1} parent=27 // pred_check_branch
          %199 = sbr.rel (%p197) target = $region36
        $region35: #{tpu_custom_call.1} parent=27 // pred_region
          %200 = dma.done %s193, 384
        $region36: #{tpu_custom_call.1} parent=27 // pred_fallthru
          _
        %s201 = sand.u32 %s44, 1
        %s202 = scalar_lea.sflag [#allocation3], %s201
        %s203 = sand.u32 %s44, 1
        %s204 = smul.addr %s203, 24
        %s205 = scalar_lea.vmem [#allocation2], %s204
        %p206 = pneg %p57
        %p207 = pneg %p54
        %s208 = sand.u32 %s72, 1
        %s209 = scalar_lea.sflag [#allocation6], %s208
        %s210 = sand.u32 %s72, 1
        %s211 = smul.addr %s210, 24
        %s212 = scalar_lea.vmem [#allocation5], %s211
        %p213 = pneg %p85
        %p214 = pneg %p82
        %p215 = pneg %p113
        %p216 = pneg %p110
        %s217 = sand.u32 %s100, 1
        %s218 = scalar_lea.sflag [#allocation4], %s217
        %s219 = sand.u32 %s100, 1
        %s220 = smul.addr %s219, 24
        %s221 = scalar_lea.vmem [#allocation7], %s220
        %v222 = vlaneseq
        %v223 = vshrl.u32 %v222, 7
        %v224 = vmul.u32 %v223, 128
        %v225 = vlaneseq
        %v226 = vand.u32 %v225, 127
        %v227 = vadd.s32 %v224, %v226
        %s228 = smul.u32 %s27, 1024
        %v229 = vld [vmem:[%s187] sm:$0xff]
        %s230 = sadd.s32 0, 8
        %s231 = scalar_lea.vmem %s187, %s230 [#allocation2]
        %v232 = vld [vmem:[%s231] sm:$0xff]
        %s233 = sadd.s32 0, 16
        %s234 = scalar_lea.vmem %s187, %s233 [#allocation2]
        %v235 = vld [vmem:[%s234] sm:$0xff]
        %v236 = vld [vmem:[%s196] sm:$0xff]
        %s237 = scalar_lea.vmem %s196, %s230 [#allocation5]
        %v238 = vld [vmem:[%s237] sm:$0xff]
        %s239 = scalar_lea.vmem %s196, %s233 [#allocation5]
        %v240 = vld [vmem:[%s239] sm:$0xff]
        %v241 = vmax.f32 %v229, 0.04045
        %v242 = vadd.f32 %v241, 0.055
        %v243 = vmul.f32 %v242, 0.9478673
        %v244 = vlog2.pop %v243
        %v245 = vmul.f32 %v244, 0.6931472
        %v246 = vmul.f32 %v245, 2.4
        %v247 = vmul.f32 %v246, 1.442695
        %v248 = vpow.pop %v247
        %vm249 = vcmp.lt.f32.partialorder %v229, 0.04045
        %v250 = vmul.f32 %v229, 0.07739938
        %v251 = vsel %vm249, %v250, %v248
        %v252 = vmax.f32 %v232, 0.04045
        %v253 = vadd.f32 %v252, 0.055
        %v254 = vmul.f32 %v253, 0.9478673
        %v255 = vlog2.pop %v254
        %v256 = vmul.f32 %v255, 0.6931472
        %v257 = vmul.f32 %v256, 2.4
        %v258 = vmul.f32 %v257, 1.442695
        %v259 = vpow.pop %v258
        %vm260 = vcmp.lt.f32.partialorder %v232, 0.04045
        %v261 = vmul.f32 %v232, 0.07739938
        %v262 = vsel %vm260, %v261, %v259
        %v263 = vmax.f32 %v235, 0.04045
        %v264 = vadd.f32 %v263, 0.055
        %v265 = vmul.f32 %v264, 0.9478673
        %v266 = vlog2.pop %v265
        %v267 = vmul.f32 %v266, 0.6931472
        %v268 = vmul.f32 %v267, 2.4
        %v269 = vmul.f32 %v268, 1.442695
        %v270 = vpow.pop %v269
        %vm271 = vcmp.lt.f32.partialorder %v235, 0.04045
        %v272 = vmul.f32 %v235, 0.07739938
        %v273 = vsel %vm271, %v272, %v270
        %v274 = vmul.f32 %v251, 0.43397832
        %v275 = vmul.f32 %v262, 0.3762416
        %v276 = vadd.f32 %v274, %v275
        %v277 = vmul.f32 %v273, 0.18983902
        %v278 = vadd.f32 %v276, %v277
        %v279 = vmul.f32 %v251, 0.212671
        %v280 = vmul.f32 %v262, 0.71516
        %v281 = vadd.f32 %v279, %v280
        %v282 = vmul.f32 %v273, 0.072169
        %v283 = vadd.f32 %v281, %v282
        %v284 = vmul.f32 %v251, 0.017757164
        %v285 = vmul.f32 %v262, 0.109471895
        %v286 = vadd.f32 %v284, %v285
        %v287 = vmul.f32 %v273, 0.8727287
        %v288 = vadd.f32 %v286, %v287
        %v289 = vmax.f32 %v278, 0.008856
        %v290 = vlog2.pop %v289
        %v291 = vmul.f32 %v290, 0.6931472
        %v292 = vmul.f32 %v291, 0.33333334
        %v293 = vmul.f32 %v292, 1.442695
        %v294 = vpow.pop %v293
        %vm295 = vcmp.gt.f32.partialorder %v278, 0.008856
        %v296 = vmul.f32 %v278, 903.3
        %v297 = vadd.f32 %v296, 16.0
        %v298 = vmul.f32 %v297, 0.00862069
        %v299 = vsel %vm295, %v294, %v298
        %v300 = vmax.f32 %v283, 0.008856
        %v301 = vlog2.pop %v300
        %v302 = vmul.f32 %v301, 0.6931472
        %v303 = vmul.f32 %v302, 0.33333334
        %v304 = vmul.f32 %v303, 1.442695
        %v305 = vpow.pop %v304
        %vm306 = vcmp.gt.f32.partialorder %v283, 0.008856
        %v307 = vmul.f32 %v283, 903.3
        %v308 = vadd.f32 %v307, 16.0
        %v309 = vmul.f32 %v308, 0.00862069
        %v310 = vsel %vm306, %v305, %v309
        %v311 = vmax.f32 %v288, 0.008856
        %v312 = vlog2.pop %v311
        %v313 = vmul.f32 %v312, 0.6931472
        %v314 = vmul.f32 %v313, 0.33333334
        %v315 = vmul.f32 %v314, 1.442695
        %v316 = vpow.pop %v315
        %vm317 = vcmp.gt.f32.partialorder %v288, 0.008856
        %v318 = vmul.f32 %v288, 903.3
        %v319 = vadd.f32 %v318, 16.0
        %v320 = vmul.f32 %v319, 0.00862069
        %v321 = vsel %vm317, %v316, %v320
        %v322 = vmul.f32 %v310, 116.0
        %v323 = vsub.f32 %v322, 16.0
        %v324 = vsub.f32 %v299, %v310
        %v325 = vmul.f32 %v324, 500.0
        %v326 = vsub.f32 %v310, %v321
        %v327 = vmul.f32 %v326, 200.0
        %v328 = vmul.f32 %v325, %v325
        %v329 = vmul.f32 %v327, %v327
        %v330 = vadd.f32 %v328, %v329
        %v331 = vrsqrt.pop %v330
        %v332 = vmul.f32 %v330, %v331
        %vm333 = vcmp.eq.f32.partialorder %v330, inf
        %v334 = vsel %vm333, %v330, %v332
        %vm335 = vcmp.eq.f32.partialorder %v330, 0.0
        %v336 = vand.u32 %v330, 2147483648
        %v337 = vsel %vm335, %v336, %v334
        %vm338 = vcmp.eq.f32.partialorder %v325, 0.0
        %v339 = vsel %vm338, 1.0, %v325
        %v340 = vrcp.pop %v339
        %v341 = vmul.f32 %v327, %v340
        %vm342 = vcmp.lt.f32.partialorder %v341, 0.0
        %vm343 = vcmp.gt.f32.partialorder %v341, 0.0
        %v344 = vsel %vm343, 1.0, 0.0
        %v345 = vsel %vm342, -1.0, %v344
        %v346 = vand.u32 2147483647, %v341
        %vm347 = vcmp.gt.f32.partialorder %v346, 2.4142137
        %vm348 = vcmp.gt.f32.partialorder %v346, 0.41421357
        %vm349 = vmxor %vm347, 1
        %vm350 = vmand %vm348, %vm349
        %v351 = vsel %vm347, %v346, 1.0
        %v352 = vrcp.pop %v351
        %v353 = vsub.f32 0.0, %v352
        %v354 = vsub.f32 %v346, 1.0
        %v355 = vadd.f32 %v346, 1.0
        %v356 = vrcp.pop %v355
        %v357 = vmul.f32 %v354, %v356
        %v358 = vsel %vm350, %v357, %v346
        %v359 = vsel %vm347, %v353, %v358
        %v360 = vsel %vm350, 0.7853982, 0.0
        %v361 = vsel %vm347, 1.5707964, %v360
        %v362 = vmul.f32 %v359, %v359
        %v363 = vmul.f32 %v362, 0.080537446
        %v364 = vsub.f32 %v363, 0.13877685
        %v365 = vmul.f32 %v364, %v362
        %v366 = vadd.f32 %v365, 0.19977711
        %v367 = vmul.f32 %v366, %v362
        %v368 = vsub.f32 %v367, 0.3333295
        %v369 = vmul.f32 %v368, %v362
        %v370 = vmul.f32 %v369, %v359
        %v371 = vadd.f32 %v370, %v359
        %v372 = vadd.f32 %v361, %v371
        %v373 = vmul.f32 %v345, %v372
        %vm374 = vcmp.gt.f32.partialorder %v325, 0.0
        %vm375 = vcmp.ge.f32.partialorder %v327, 0.0
        %v376 = vadd.f32 %v373, 3.1415927
        %v377 = vsub.f32 %v373, 3.1415927
        %v378 = vsel %vm375, %v376, %v377
        %v379 = vsel %vm374, %v373, %v378
        %vm380 = vcmp.gt.f32.partialorder %v327, 0.0
        %vm381 = vcmp.lt.f32.partialorder %v327, 0.0
        %v382 = vsel %vm381, -1.5707964, 0.0
        %v383 = vsel %vm380, 1.5707964, %v382
        %v384 = vsel %vm338, %v383, %v379
        %v385 = vmul.f32 %v384, 0.63661975
        %vm386 = vcmp.lt.f32.partialorder %v385, 0.0
        %v387 = vadd.f32 %v385, 4.0
        %v388 = vsel %vm386, %v387, %v385
        %v389 = vmax.f32 %v236, 0.04045
        %v390 = vadd.f32 %v389, 0.055
        %v391 = vmul.f32 %v390, 0.9478673
        %v392 = vlog2.pop %v391
        %v393 = vmul.f32 %v392, 0.6931472
        %v394 = vmul.f32 %v393, 2.4
        %v395 = vmul.f32 %v394, 1.442695
        %v396 = vpow.pop %v395
        %vm397 = vcmp.lt.f32.partialorder %v236, 0.04045
        %v398 = vmul.f32 %v236, 0.07739938
        %v399 = vsel %vm397, %v398, %v396
        %v400 = vmax.f32 %v238, 0.04045
        %v401 = vadd.f32 %v400, 0.055
        %v402 = vmul.f32 %v401, 0.9478673
        %v403 = vlog2.pop %v402
        %v404 = vmul.f32 %v403, 0.6931472
        %v405 = vmul.f32 %v404, 2.4
        %v406 = vmul.f32 %v405, 1.442695
        %v407 = vpow.pop %v406
        %vm408 = vcmp.lt.f32.partialorder %v238, 0.04045
        %v409 = vmul.f32 %v238, 0.07739938
        %v410 = vsel %vm408, %v409, %v407
        %v411 = vmax.f32 %v240, 0.04045
        %v412 = vadd.f32 %v411, 0.055
        %v413 = vmul.f32 %v412, 0.9478673
        %v414 = vlog2.pop %v413
        %v415 = vmul.f32 %v414, 0.6931472
        %v416 = vmul.f32 %v415, 2.4
        %v417 = vmul.f32 %v416, 1.442695
        %v418 = vpow.pop %v417
        %vm419 = vcmp.lt.f32.partialorder %v240, 0.04045
        %v420 = vmul.f32 %v240, 0.07739938
        %v421 = vsel %vm419, %v420, %v418
        %v422 = vmul.f32 %v399, 0.43397832
        %v423 = vmul.f32 %v410, 0.3762416
        %v424 = vadd.f32 %v422, %v423
        %v425 = vmul.f32 %v421, 0.18983902
        %v426 = vadd.f32 %v424, %v425
        %v427 = vmul.f32 %v399, 0.212671
        %v428 = vmul.f32 %v410, 0.71516
        %v429 = vadd.f32 %v427, %v428
        %v430 = vmul.f32 %v421, 0.072169
        %v431 = vadd.f32 %v429, %v430
        %v432 = vmul.f32 %v399, 0.017757164
        %v433 = vmul.f32 %v410, 0.109471895
        %v434 = vadd.f32 %v432, %v433
        %v435 = vmul.f32 %v421, 0.8727287
        %v436 = vadd.f32 %v434, %v435
        %v437 = vmax.f32 %v426, 0.008856
        %v438 = vlog2.pop %v437
        %v439 = vmul.f32 %v438, 0.6931472
        %v440 = vmul.f32 %v439, 0.33333334
        %v441 = vmul.f32 %v440, 1.442695
        %v442 = vpow.pop %v441
        %vm443 = vcmp.gt.f32.partialorder %v426, 0.008856
        %v444 = vmul.f32 %v426, 903.3
        %v445 = vadd.f32 %v444, 16.0
        %v446 = vmul.f32 %v445, 0.00862069
        %v447 = vsel %vm443, %v442, %v446
        %v448 = vmax.f32 %v431, 0.008856
        %v449 = vlog2.pop %v448
        %v450 = vmul.f32 %v449, 0.6931472
        %v451 = vmul.f32 %v450, 0.33333334
        %v452 = vmul.f32 %v451, 1.442695
        %v453 = vpow.pop %v452
        %vm454 = vcmp.gt.f32.partialorder %v431, 0.008856
        %v455 = vmul.f32 %v431, 903.3
        %v456 = vadd.f32 %v455, 16.0
        %v457 = vmul.f32 %v456, 0.00862069
        %v458 = vsel %vm454, %v453, %v457
        %v459 = vmax.f32 %v436, 0.008856
        %v460 = vlog2.pop %v459
        %v461 = vmul.f32 %v460, 0.6931472
        %v462 = vmul.f32 %v461, 0.33333334
        %v463 = vmul.f32 %v462, 1.442695
        %v464 = vpow.pop %v463
        %vm465 = vcmp.gt.f32.partialorder %v436, 0.008856
        %v466 = vmul.f32 %v436, 903.3
        %v467 = vadd.f32 %v466, 16.0
        %v468 = vmul.f32 %v467, 0.00862069
        %v469 = vsel %vm465, %v464, %v468
        %v470 = vmul.f32 %v458, 116.0
        %v471 = vsub.f32 %v470, 16.0
        %v472 = vsub.f32 %v447, %v458
        %v473 = vmul.f32 %v472, 500.0
        %v474 = vsub.f32 %v458, %v469
        %v475 = vmul.f32 %v474, 200.0
        %v476 = vmul.f32 %v473, %v473
        %v477 = vmul.f32 %v475, %v475
        %v478 = vadd.f32 %v476, %v477
        %v479 = vrsqrt.pop %v478
        %v480 = vmul.f32 %v478, %v479
        %vm481 = vcmp.eq.f32.partialorder %v478, inf
        %v482 = vsel %vm481, %v478, %v480
        %vm483 = vcmp.eq.f32.partialorder %v478, 0.0
        %v484 = vand.u32 %v478, 2147483648
        %v485 = vsel %vm483, %v484, %v482
        %vm486 = vcmp.eq.f32.partialorder %v473, 0.0
        %v487 = vsel %vm486, 1.0, %v473
        %v488 = vrcp.pop %v487
        %v489 = vmul.f32 %v475, %v488
        %vm490 = vcmp.lt.f32.partialorder %v489, 0.0
        %vm491 = vcmp.gt.f32.partialorder %v489, 0.0
        %v492 = vsel %vm491, 1.0, 0.0
        %v493 = vsel %vm490, -1.0, %v492
        %v494 = vand.u32 2147483647, %v489
        %vm495 = vcmp.gt.f32.partialorder %v494, 2.4142137
        %vm496 = vcmp.gt.f32.partialorder %v494, 0.41421357
        %vm497 = vmxor %vm495, 1
        %vm498 = vmand %vm496, %vm497
        %v499 = vsel %vm495, %v494, 1.0
        %v500 = vrcp.pop %v499
        %v501 = vsub.f32 0.0, %v500
        %v502 = vsub.f32 %v494, 1.0
        %v503 = vadd.f32 %v494, 1.0
        %v504 = vrcp.pop %v503
        %v505 = vmul.f32 %v502, %v504
        %v506 = vsel %vm498, %v505, %v494
        %v507 = vsel %vm495, %v501, %v506
        %v508 = vsel %vm498, 0.7853982, 0.0
        %v509 = vsel %vm495, 1.5707964, %v508
        %v510 = vmul.f32 %v507, %v507
        %v511 = vmul.f32 %v510, 0.080537446
        %v512 = vsub.f32 %v511, 0.13877685
        %v513 = vmul.f32 %v512, %v510
        %v514 = vadd.f32 %v513, 0.19977711
        %v515 = vmul.f32 %v514, %v510
        %v516 = vsub.f32 %v515, 0.3333295
        %v517 = vmul.f32 %v516, %v510
        %v518 = vmul.f32 %v517, %v507
        %v519 = vadd.f32 %v518, %v507
        %v520 = vadd.f32 %v509, %v519
        %v521 = vmul.f32 %v493, %v520
        %vm522 = vcmp.gt.f32.partialorder %v473, 0.0
        %vm523 = vcmp.ge.f32.partialorder %v475, 0.0
        %v524 = vadd.f32 %v521, 3.1415927
        %v525 = vsub.f32 %v521, 3.1415927
        %v526 = vsel %vm523, %v524, %v525
        %v527 = vsel %vm522, %v521, %v526
        %vm528 = vcmp.gt.f32.partialorder %v475, 0.0
        %vm529 = vcmp.lt.f32.partialorder %v475, 0.0
        %v530 = vsel %vm529, -1.5707964, 0.0
        %v531 = vsel %vm528, 1.5707964, %v530
        %v532 = vsel %vm486, %v531, %v527
        %v533 = vmul.f32 %v532, 0.63661975
        %vm534 = vcmp.lt.f32.partialorder %v533, 0.0
        %v535 = vadd.f32 %v533, 4.0
        %v536 = vsel %vm534, %v535, %v533
        %v537 = vsub.f32 %v323, %v471
        %v538 = vand.u32 2147483647, %v537
        %v539 = vsub.f32 %v337, %v485
        %v540 = vand.u32 2147483647, %v539
        %v541 = vsub.f32 %v388, 3.0
        %v542 = vand.u32 2147483647, %v541
        %v543 = vsub.f32 1.0, %v542
        %v544 = vmax.f32 %v543, 0.0
        %v545 = vsub.f32 %v536, 3.0
        %v546 = vand.u32 2147483647, %v545
        %v547 = vsub.f32 1.0, %v546
        %v548 = vmax.f32 %v547, 0.0
        %v549 = vand.u32 2147483647, %v388
        %v550 = vsub.f32 1.0, %v549
        %v551 = vmax.f32 %v550, 0.0
        %v552 = vand.u32 2147483647, %v536
        %v553 = vsub.f32 1.0, %v552
        %v554 = vmax.f32 %v553, 0.0
        %v555 = vadd.f32 %v551, %v544
        %v556 = vadd.f32 %v554, %v548
        %v557 = vmax.f32 %v556, 0.001
        %v558 = vmin.f32 %v557, 0.999
        %v559 = vadd.f32 %v555, 0.01
        %v560 = vlog2.pop %v559
        %v561 = vmul.f32 %v560, 0.6931472
        %v562 = vmul.f32 %v558, %v561
        %v563 = vsub.f32 %v388, 1.0
        %v564 = vand.u32 2147483647, %v563
        %v565 = vsub.f32 1.0, %v564
        %v566 = vmax.f32 %v565, 0.0
        %v567 = vsub.f32 %v536, 1.0
        %v568 = vand.u32 2147483647, %v567
        %v569 = vsub.f32 1.0, %v568
        %v570 = vmax.f32 %v569, 0.0
        %v571 = vmax.f32 %v570, 0.001
        %v572 = vmin.f32 %v571, 0.999
        %v573 = vadd.f32 %v566, 0.01
        %v574 = vlog2.pop %v573
        %v575 = vmul.f32 %v574, 0.6931472
        %v576 = vmul.f32 %v572, %v575
        %v577 = vadd.f32 %v558, %v572
        %v578 = vadd.f32 %v562, %v576
        %v579 = vsub.f32 %v388, 2.0
        %v580 = vand.u32 2147483647, %v579
        %v581 = vsub.f32 1.0, %v580
        %v582 = vmax.f32 %v581, 0.0
        %v583 = vsub.f32 %v536, 2.0
        %v584 = vand.u32 2147483647, %v583
        %v585 = vsub.f32 1.0, %v584
        %v586 = vmax.f32 %v585, 0.0
        %v587 = vmax.f32 %v586, 0.001
        %v588 = vmin.f32 %v587, 0.999
        %v589 = vadd.f32 %v582, 0.01
        %v590 = vlog2.pop %v589
        %v591 = vmul.f32 %v590, 0.6931472
        %v592 = vmul.f32 %v588, %v591
        %v593 = vadd.f32 %v577, %v588
        %v594 = vadd.f32 %v578, %v592
        %v595 = vmax.f32 %v548, 0.001
        %v596 = vmin.f32 %v595, 0.999
        %v597 = vadd.f32 %v544, 0.01
        %v598 = vlog2.pop %v597
        %v599 = vmul.f32 %v598, 0.6931472
        %v600 = vmul.f32 %v596, %v599
        %v601 = vadd.f32 %v593, %v596
        %v602 = vadd.f32 %v594, %v600
        %v603 = vmul.f32 %v601, -0.039220713
        %v604 = vadd.f32 %v602, %v603
        %v605 = vsub.f32 0.0, %v604
        %s606 = smul.u32 0, 128
        %s607 = sadd.s32 %s228, %s606
        %v608 = vstv %s607
        %v609 = vadd.s32 %v227, %v608
        %vm610 = vcmp.lt.s32.totalorder %v609, 256
        %v611 = vsel %vm610, %v605, 0.0
        %v612 = vadd.f32 %v538, 0.0
        %v613 = vadd.f32 %v540, 0.0
        %v614 = vadd.f32 %v611, 0.0
        %615 = vst [vmem:[%s221] sm:$0xff] %v612
        %s616 = scalar_lea.vmem %s221, 8 [#allocation7]
        %617 = vst [vmem:[%s616] sm:$0xff] %v613
        %s618 = scalar_lea.vmem %s221, 16 [#allocation7]
        %619 = vst [vmem:[%s618] sm:$0xff] %v614
        %s620 = sand.u32 %s100, 1
        %s621 = scalar_lea.sflag [#allocation4], %s620
        %s622 = sand.u32 %s100, 1
        %s623 = smul.addr %s622, 24
        %s624 = scalar_lea.vmem [#allocation7], %s623
        // Predicated region
        $region37: #{tpu_custom_call.1} parent=27 // pred_check
          %p625 = pneg %p110
        $region38: #{tpu_custom_call.1} parent=27 // pred_check_branch
          %627 = sbr.rel (%p625) target = $region40
        $region39: #{tpu_custom_call.1} parent=27 // pred_region
          %s629 = ssub.s32 384, 384
          %630 = vsyncadd %s621, %s629
          %s631 = smul.addr %s27, 3
          %s632 = smul.addr %s26, 3
          %s633 = sadd.s32 %s631, %s632
          %s634 = smul.addr %s633, 128
          %s635 = scalar_lea.hbm %s2, %s634
          %s636 = sshll.u32 %s624, 4
          %s637 = int_to_ptr.vmem [resolvable:$true] %s636
          %642 = dma.vmem_to_hbm [thread:$0]  %s637, 384, %s635, %s621, 128, 128, 8
        $region40: #{tpu_custom_call.1} parent=27 // pred_fallthru
          _
      $region28: #{tpu_custom_call.1} parent=5 // pred_fallthru
        _
      %p643 = scmp.le.s32.totalorder 2, %s17
      // Predicated region
      $region41: #{tpu_custom_call.1} parent=5 // pred_check
        %p644 = pneg %p643
      $region42: #{tpu_custom_call.1} parent=5 // pred_check_branch
        %646 = sbr.rel (%p644) target = $region44
      $region43: #{tpu_custom_call.1} parent=5 // pred_region
        %s647 = ssub.s32 %s17, 2
        // Predicated region
        $region45: #{tpu_custom_call.1} parent=43 // pred_check
          %p648 = pneg %p116
        $region46: #{tpu_custom_call.1} parent=43 // pred_check_branch
          %650 = sbr.rel (%p648) target = $region48
        $region47: #{tpu_custom_call.1} parent=43 // pred_region
          %s651 = sand.u32 %s101, 1
          %s652 = scalar_lea.sflag [#allocation4], %s651
          %s653 = sand.u32 %s101, 1
          %s654 = smul.addr %s653, 24
          %s655 = scalar_lea.vmem [#allocation7], %s654
          %656 = dma.done %s652, 384
        $region48: #{tpu_custom_call.1} parent=43 // pred_fallthru
          _
      $region44: #{tpu_custom_call.1} parent=5 // pred_fallthru
        _
    $region6: #{tpu_custom_call.1} parent=1 // loop_footer
      %s21 = sadd.s32 1, %s17
    $region7: #{tpu_custom_call.1} parent=1 // loop_footer_branch
      %16 = sbr.rel target = $region3
    $region8: #{tpu_custom_call.1} parent=1 // loop_exit
      _
    %657 = vsyncpa [#allocation3], 1
    %s658 = scalar_lea.sflag [#allocation3], 1
    %659 = vsyncpa %s658, 1
    %660 = vsyncpa [#allocation6], 1
    %s661 = scalar_lea.sflag [#allocation6], 1
    %662 = vsyncpa %s661, 1
    %663 = vsyncpa [#allocation4], 1
    %s664 = scalar_lea.sflag [#allocation4], 1
    %665 = vsyncpa %s664, 1

</llo_original>
